<compile_context>
chip_gen: v5e
topology: v5e:2x2
jax: 0.10.0
libtpu: 0.0.40
codegen_flags: <defaults>
</compile_context>

<pallas_src>
import jax
import jax.numpy as jnp
from jax import lax
from jax.experimental import pallas as pl
from jax.experimental.pallas import tpu as pltpu

SOW_TOKEN = 0
MAX_LENGTH = 8


def decoder_kernel(gru_tbl_ref,  # (VP+HP, 4*HP) bf16 fused table: [r | z | gi_n | gh_n]
                   fcw_ref,      # (HP, VP)      bf16 fc weight^T (zero padded)
                   fcb_ref,      # (1, VP)       f32  fc bias (-1e30 on pad lanes)
                   h0_ref,       # (B, HP)       f32  initial hidden (zero padded)
                   out_ref,      # (MAX_LENGTH, B, VP) f32 log-probs (time-major)
                   hout_ref):    # (B, HP)       f32  final hidden
    B, HP = h0_ref.shape
    VP = fcb_ref.shape[1]

    # ---- loop-invariant loads / broadcasts, hoisted out of the unrolled loop ----
    gru_tbl = gru_tbl_ref[...]                                     # (VP+HP, 4*HP) bf16
    fcw = fcw_ref[...]                                             # (HP, VP) bf16
    fcb = jnp.broadcast_to(fcb_ref[...], (B, VP))                  # (B, VP) f32
    lane_v = lax.broadcasted_iota(jnp.int32, (B, VP), 1)

    # carried state lives in vregs (loop is fully unrolled)
    h = h0_ref[...]                                                # (B, HP) f32
    tok = (lane_v == SOW_TOKEN).astype(jnp.bfloat16)               # (B, VP) one-hot

    for t in range(MAX_LENGTH):
        # single fused MXU contraction: [one_hot | h] @ [gi_tbl ; W_hh^T]
        x = jnp.concatenate([tok, h.astype(jnp.bfloat16)], axis=1)  # (B, VP+HP)
        g = jnp.dot(x, gru_tbl, preferred_element_type=jnp.float32)  # (B, 4*HP)

        # GRU cell (PyTorch gate order r, z, n) — lane-aligned 128-wide slices
        r = jax.nn.sigmoid(g[:, 0:HP])                  # W_ir x + b_ir + W_hr h + b_hr
        z = jax.nn.sigmoid(g[:, HP:2 * HP])             # W_iz x + b_iz + W_hz h + b_hz
        n = jnp.tanh(g[:, 2 * HP:3 * HP]                # (W_in x + b_in)
                     + r * g[:, 3 * HP:4 * HP])         #  + r * (W_hn h + b_hn)
        h = (1.0 - z) * n + z * h                       # padded lanes stay exactly 0

        # logits = fc(h)
        logits = jnp.dot(h.astype(jnp.bfloat16), fcw,
                         preferred_element_type=jnp.float32) + fcb  # (B, VP)

        # fused log_softmax — reuses the max also needed for the greedy argmax;
        # pad lanes carry -1e30 so they never win the max and contribute 0 to the sum.
        mx = jnp.max(logits, axis=-1, keepdims=True)
        lse = jnp.log(jnp.sum(jnp.exp(logits - mx), axis=-1, keepdims=True)) + mx
        out_ref[t] = logits - lse                        # lane-dense 128-wide store

        # greedy next token: argmax(-1) -> one-hot (first-max tie break)
        is_max = logits >= mx
        first_idx = jnp.min(jnp.where(is_max, lane_v, VP), axis=-1, keepdims=True)
        tok = (lane_v == first_idx).astype(jnp.bfloat16)

    hout_ref[...] = h


def _pad_up(n, m):
    return ((n + m - 1) // m) * m


def decoder_forward(params, enc_outputs, enc_hidden):
    """Mirrors Decoder.forward(enc_outputs, enc_hidden, tgt_tensor=None)."""
    B = enc_outputs.shape[0]
    V, H = params["embed"].shape
    VP = max(_pad_up(V, 128), 128)
    HP = max(_pad_up(H, 128), 128)
    f32 = jnp.float32

    # ---- loop-invariant algebra, done once in the wrapper (all in f32) ----------
    # gi(v) = relu(embed[v]) @ W_ih^T + b_ih   for every vocab id v  -> (V, 3H)
    x_tbl = jnp.maximum(params["embed"].astype(f32), 0.0)                    # (V, H)
    gi = x_tbl @ params["w_ih"].astype(f32).T + params["b_ih"].astype(f32)[None, :]
    b_hh = params["b_hh"].astype(f32)
    whh_t = params["w_hh"].astype(f32).T                                     # (H, 3H)

    # Fused GRU table, column blocks (each padded to 128 lanes): [r | z | gi_n | gh_n]
    #   token rows  (0..V):     gi_r+b_hr | gi_z+b_hz | gi_n | b_hn (bias injected once)
    #   hidden rows (VP..VP+H): W_hr^T    | W_hz^T    |  0   | W_hn^T
    tbl = jnp.zeros((VP + HP, 4 * HP), f32)
    tbl = tbl.at[:V, 0:H].set(gi[:, 0:H] + b_hh[0:H][None, :])
    tbl = tbl.at[:V, HP:HP + H].set(gi[:, H:2 * H] + b_hh[H:2 * H][None, :])
    tbl = tbl.at[:V, 2 * HP:2 * HP + H].set(gi[:, 2 * H:3 * H])
    tbl = tbl.at[:V, 3 * HP:3 * HP + H].set(
        jnp.broadcast_to(b_hh[2 * H:3 * H][None, :], (V, H)))
    tbl = tbl.at[VP:VP + H, 0:H].set(whh_t[:, 0:H])
    tbl = tbl.at[VP:VP + H, HP:HP + H].set(whh_t[:, H:2 * H])
    tbl = tbl.at[VP:VP + H, 3 * HP:3 * HP + H].set(whh_t[:, 2 * H:3 * H])
    gru_tbl = tbl.astype(jnp.bfloat16)                                       # (VP+HP, 4HP)

    fcw = (jnp.zeros((HP, VP), f32)
           .at[:H, :V].set(params["fc_w"].astype(f32).T)
           .astype(jnp.bfloat16))                                            # (HP, VP)
    NEG = jnp.float32(-1e30)  # pad-lane logits: never win argmax, exp() underflows to 0
    fcb = jnp.full((1, VP), NEG, f32).at[0, :V].set(params["fc_b"].astype(f32))
    h0 = jnp.zeros((B, HP), f32).at[:, :H].set(enc_hidden[0].astype(f32))

    vmem = pl.BlockSpec(memory_space=pltpu.MemorySpace.VMEM)
    out_tbv, h_final = pl.pallas_call(
        decoder_kernel,
        out_shape=(jax.ShapeDtypeStruct((MAX_LENGTH, B, VP), jnp.float32),
                   jax.ShapeDtypeStruct((B, HP), jnp.float32)),
        in_specs=[vmem] * 4,
        out_specs=(vmem, vmem),
    )(gru_tbl, fcw, fcb, h0)

    log_probs = jnp.transpose(out_tbv, (1, 0, 2))[:, :, :V]      # (B, MAX_LENGTH, V)
    hidden = h_final[:, :H][None]                                # (1, B, H)
    return log_probs, hidden, None


if __name__ == "__main__":
    B, H, V, S_ENC = 2, 32, 16, 8   # batch, hidden_size, output_dim (vocab), enc seq

    key = jax.random.PRNGKey(0)
    ks = jax.random.split(key, 9)
    params = dict(
        embed=0.1 * jax.random.normal(ks[0], (V, H), jnp.float32),
        w_ih=0.1 * jax.random.normal(ks[1], (3 * H, H), jnp.float32),
        w_hh=0.1 * jax.random.normal(ks[2], (3 * H, H), jnp.float32),
        b_ih=0.1 * jax.random.normal(ks[3], (3 * H,), jnp.float32),
        b_hh=0.1 * jax.random.normal(ks[4], (3 * H,), jnp.float32),
        fc_w=0.1 * jax.random.normal(ks[5], (V, H), jnp.float32),
        fc_b=0.1 * jax.random.normal(ks[6], (V,), jnp.float32),
    )
    enc_outputs = jax.random.normal(ks[7], (B, S_ENC, H), jnp.float32)  # only batch dim used
    enc_hidden = jax.random.normal(ks[8], (1, B, H), jnp.float32)       # (num_layers, B, H)

    log_probs, h_final, _ = decoder_forward(params, enc_outputs, enc_hidden)
    jax.block_until_ready((log_probs, h_final))

    assert log_probs.shape == (B, MAX_LENGTH, V)
    assert h_final.shape == (1, B, H)
    assert bool(jnp.all(jnp.isfinite(log_probs)))
    # log_softmax sanity: probabilities sum to 1 along vocab
    assert bool(jnp.allclose(jnp.sum(jnp.exp(log_probs), axis=-1), 1.0, atol=1e-4))

    print("KERNEL_OK")
</pallas_src>

<mosaic_0001>
module attributes {stable_mosaic.version = 11 : i64} {
  func.func @decoder_kernel(%arg0: memref<256x512xbf16, #tpu.memory_space<vmem>>, %arg1: memref<128x128xbf16, #tpu.memory_space<vmem>>, %arg2: memref<1x128xf32, #tpu.memory_space<vmem>>, %arg3: memref<2x128xf32, #tpu.memory_space<vmem>>, %arg4: memref<8x2x128xf32, #tpu.memory_space<vmem>>, %arg5: memref<2x128xf32, #tpu.memory_space<vmem>>) attributes {dimension_semantics = [], scalar_prefetch = 0 : i64, scratch_operands = 0 : i64, tpu.core_type = #tpu.core_type<tc>} {
    %c0 = arith.constant 0 : index
    %c0_0 = arith.constant 0 : index
    %0 = vector.load %arg0[%c0, %c0_0] : memref<256x512xbf16, #tpu.memory_space<vmem>>, vector<256x512xbf16>
    %c0_1 = arith.constant 0 : index
    %c0_2 = arith.constant 0 : index
    %1 = vector.load %arg1[%c0_1, %c0_2] : memref<128x128xbf16, #tpu.memory_space<vmem>>, vector<128x128xbf16>
    %c0_3 = arith.constant 0 : index
    %c0_4 = arith.constant 0 : index
    %2 = vector.load %arg2[%c0_3, %c0_4] : memref<1x128xf32, #tpu.memory_space<vmem>>, vector<1x128xf32>
    %3 = vector.shape_cast %2 : vector<1x128xf32> to vector<1x128xf32>
    %4 = vector.broadcast %3 : vector<1x128xf32> to vector<2x128xf32>
    %5 = tpu.iota {dimensions = array<i32: 1>} : vector<2x128xi32>
    %c0_5 = arith.constant 0 : index
    %c0_6 = arith.constant 0 : index
    %6 = vector.load %arg3[%c0_5, %c0_6] : memref<2x128xf32, #tpu.memory_space<vmem>>, vector<2x128xf32>
    %c0_i32 = arith.constant 0 : i32
    %7 = vector.broadcast %c0_i32 : i32 to vector<2x128xi32>
    %8 = arith.cmpi eq, %5, %7 : vector<2x128xi32>
    %9 = arith.extui %8 : vector<2x128xi1> to vector<2x128xi32>
    %10 = arith.sitofp %9 : vector<2x128xi32> to vector<2x128xf32>
    %11 = arith.truncf %10 : vector<2x128xf32> to vector<2x128xbf16>
    %12 = arith.truncf %6 : vector<2x128xf32> to vector<2x128xbf16>
    %13 = tpu.concatenate %11, %12 in 1 : vector<2x128xbf16>, vector<2x128xbf16> -> vector<2x256xbf16>
    %cst = arith.constant dense<0.000000e+00> : vector<2x512xf32>
    %14 = tpu.matmul %13, %0, %cst {dimension_numbers = #tpu.dot_dimension_numbers<[1], [0], [0], [1], [0, 0, 1, 1], [], []>} : vector<2x256xbf16>, vector<256x512xbf16>, vector<2x512xf32> -> vector<2x512xf32>
    %15 = vector.extract_strided_slice %14 {offsets = [0, 0], sizes = [2, 128], strides = [1, 1]} : vector<2x512xf32> to vector<2x128xf32>
    %16 = arith.negf %15 : vector<2x128xf32>
    %17 = math.exp %16 : vector<2x128xf32>
    %cst_7 = arith.constant 1.000000e+00 : f32
    %18 = vector.broadcast %cst_7 : f32 to vector<2x128xf32>
    %19 = arith.addf %18, %17 : vector<2x128xf32>
    %20 = arith.divf %18, %19 : vector<2x128xf32>
    %21 = vector.extract_strided_slice %14 {offsets = [0, 128], sizes = [2, 128], strides = [1, 1]} : vector<2x512xf32> to vector<2x128xf32>
    %22 = arith.negf %21 : vector<2x128xf32>
    %23 = math.exp %22 : vector<2x128xf32>
    %cst_8 = arith.constant 1.000000e+00 : f32
    %24 = vector.broadcast %cst_8 : f32 to vector<2x128xf32>
    %25 = arith.addf %24, %23 : vector<2x128xf32>
    %26 = arith.divf %24, %25 : vector<2x128xf32>
    %27 = vector.extract_strided_slice %14 {offsets = [0, 256], sizes = [2, 128], strides = [1, 1]} : vector<2x512xf32> to vector<2x128xf32>
    %28 = vector.extract_strided_slice %14 {offsets = [0, 384], sizes = [2, 128], strides = [1, 1]} : vector<2x512xf32> to vector<2x128xf32>
    %29 = arith.mulf %20, %28 : vector<2x128xf32>
    %30 = arith.addf %27, %29 : vector<2x128xf32>
    %31 = math.tanh %30 : vector<2x128xf32>
    %cst_9 = arith.constant 1.000000e+00 : f32
    %32 = vector.broadcast %cst_9 : f32 to vector<2x128xf32>
    %33 = arith.subf %32, %26 : vector<2x128xf32>
    %34 = arith.mulf %33, %31 : vector<2x128xf32>
    %35 = arith.mulf %26, %6 : vector<2x128xf32>
    %36 = arith.addf %34, %35 : vector<2x128xf32>
    %37 = arith.truncf %36 : vector<2x128xf32> to vector<2x128xbf16>
    %cst_10 = arith.constant dense<0.000000e+00> : vector<2x128xf32>
    %38 = tpu.matmul %37, %1, %cst_10 {dimension_numbers = #tpu.dot_dimension_numbers<[1], [0], [0], [1], [0, 0, 1, 1], [], []>} : vector<2x128xbf16>, vector<128x128xbf16>, vector<2x128xf32> -> vector<2x128xf32>
    %39 = arith.addf %38, %4 : vector<2x128xf32>
    %cst_11 = arith.constant dense<0xFF800000> : vector<2xf32>
    %40 = vector.multi_reduction <maximumf>, %39, %cst_11 [1] : vector<2x128xf32> to vector<2xf32>
    %41 = vector.shape_cast %40 : vector<2xf32> to vector<2x1xf32>
    %42 = vector.broadcast %41 : vector<2x1xf32> to vector<2x128xf32>
    %43 = arith.subf %39, %42 : vector<2x128xf32>
    %44 = math.exp %43 : vector<2x128xf32>
    %cst_12 = arith.constant dense<0.000000e+00> : vector<2xf32>
    %45 = vector.multi_reduction <add>, %44, %cst_12 [1] : vector<2x128xf32> to vector<2xf32>
    %46 = vector.shape_cast %45 : vector<2xf32> to vector<2x1xf32>
    %47 = math.log %46 : vector<2x1xf32>
    %48 = arith.addf %47, %41 : vector<2x1xf32>
    %49 = vector.broadcast %48 : vector<2x1xf32> to vector<2x128xf32>
    %50 = arith.subf %39, %49 : vector<2x128xf32>
    %c0_13 = arith.constant 0 : index
    %c0_14 = arith.constant 0 : index
    %c0_15 = arith.constant 0 : index
    %51 = vector.load %arg4[%c0_13, %c0_14, %c0_15] : memref<8x2x128xf32, #tpu.memory_space<vmem>>, vector<1x2x128xf32>
    %52 = vector.shape_cast %51 : vector<1x2x128xf32> to vector<2x128xf32>
    %53 = vector.shape_cast %50 : vector<2x128xf32> to vector<1x2x128xf32>
    tpu.vector_store %arg4[%c0_13, %c0_14, %c0_15], %53 {strides = array<i32>} : memref<8x2x128xf32, #tpu.memory_space<vmem>>, vector<1x2x128xf32>,
    %54 = vector.broadcast %41 : vector<2x1xf32> to vector<2x128xf32>
    %55 = arith.cmpf oge, %39, %54 : vector<2x128xf32>
    %c128_i32 = arith.constant 128 : i32
    %56 = vector.broadcast %c128_i32 : i32 to vector<2x128xi32>
    %57 = arith.select %55, %5, %56 : vector<2x128xi1>, vector<2x128xi32>
    %cst_16 = arith.constant dense<2147483647> : vector<2xi32>
    %58 = vector.multi_reduction <minsi>, %57, %cst_16 [1] : vector<2x128xi32> to vector<2xi32>
    %59 = vector.shape_cast %58 : vector<2xi32> to vector<2x1xi32>
    %60 = vector.broadcast %59 : vector<2x1xi32> to vector<2x128xi32>
    %61 = arith.cmpi eq, %5, %60 : vector<2x128xi32>
    %62 = arith.extui %61 : vector<2x128xi1> to vector<2x128xi32>
    %63 = arith.sitofp %62 : vector<2x128xi32> to vector<2x128xf32>
    %64 = arith.truncf %63 : vector<2x128xf32> to vector<2x128xbf16>
    %65 = arith.truncf %36 : vector<2x128xf32> to vector<2x128xbf16>
    %66 = tpu.concatenate %64, %65 in 1 : vector<2x128xbf16>, vector<2x128xbf16> -> vector<2x256xbf16>
    %cst_17 = arith.constant dense<0.000000e+00> : vector<2x512xf32>
    %67 = tpu.matmul %66, %0, %cst_17 {dimension_numbers = #tpu.dot_dimension_numbers<[1], [0], [0], [1], [0, 0, 1, 1], [], []>} : vector<2x256xbf16>, vector<256x512xbf16>, vector<2x512xf32> -> vector<2x512xf32>
    %68 = vector.extract_strided_slice %67 {offsets = [0, 0], sizes = [2, 128], strides = [1, 1]} : vector<2x512xf32> to vector<2x128xf32>
    %69 = arith.negf %68 : vector<2x128xf32>
    %70 = math.exp %69 : vector<2x128xf32>
    %cst_18 = arith.constant 1.000000e+00 : f32
    %71 = vector.broadcast %cst_18 : f32 to vector<2x128xf32>
    %72 = arith.addf %71, %70 : vector<2x128xf32>
    %73 = arith.divf %71, %72 : vector<2x128xf32>
    %74 = vector.extract_strided_slice %67 {offsets = [0, 128], sizes = [2, 128], strides = [1, 1]} : vector<2x512xf32> to vector<2x128xf32>
    %75 = arith.negf %74 : vector<2x128xf32>
    %76 = math.exp %75 : vector<2x128xf32>
    %cst_19 = arith.constant 1.000000e+00 : f32
    %77 = vector.broadcast %cst_19 : f32 to vector<2x128xf32>
    %78 = arith.addf %77, %76 : vector<2x128xf32>
    %79 = arith.divf %77, %78 : vector<2x128xf32>
    %80 = vector.extract_strided_slice %67 {offsets = [0, 256], sizes = [2, 128], strides = [1, 1]} : vector<2x512xf32> to vector<2x128xf32>
    %81 = vector.extract_strided_slice %67 {offsets = [0, 384], sizes = [2, 128], strides = [1, 1]} : vector<2x512xf32> to vector<2x128xf32>
    %82 = arith.mulf %73, %81 : vector<2x128xf32>
    %83 = arith.addf %80, %82 : vector<2x128xf32>
    %84 = math.tanh %83 : vector<2x128xf32>
    %cst_20 = arith.constant 1.000000e+00 : f32
    %85 = vector.broadcast %cst_20 : f32 to vector<2x128xf32>
    %86 = arith.subf %85, %79 : vector<2x128xf32>
    %87 = arith.mulf %86, %84 : vector<2x128xf32>
    %88 = arith.mulf %79, %36 : vector<2x128xf32>
    %89 = arith.addf %87, %88 : vector<2x128xf32>
    %90 = arith.truncf %89 : vector<2x128xf32> to vector<2x128xbf16>
    %cst_21 = arith.constant dense<0.000000e+00> : vector<2x128xf32>
    %91 = tpu.matmul %90, %1, %cst_21 {dimension_numbers = #tpu.dot_dimension_numbers<[1], [0], [0], [1], [0, 0, 1, 1], [], []>} : vector<2x128xbf16>, vector<128x128xbf16>, vector<2x128xf32> -> vector<2x128xf32>
    %92 = arith.addf %91, %4 : vector<2x128xf32>
    %cst_22 = arith.constant dense<0xFF800000> : vector<2xf32>
    %93 = vector.multi_reduction <maximumf>, %92, %cst_22 [1] : vector<2x128xf32> to vector<2xf32>
    %94 = vector.shape_cast %93 : vector<2xf32> to vector<2x1xf32>
    %95 = vector.broadcast %94 : vector<2x1xf32> to vector<2x128xf32>
    %96 = arith.subf %92, %95 : vector<2x128xf32>
    %97 = math.exp %96 : vector<2x128xf32>
    %cst_23 = arith.constant dense<0.000000e+00> : vector<2xf32>
    %98 = vector.multi_reduction <add>, %97, %cst_23 [1] : vector<2x128xf32> to vector<2xf32>
    %99 = vector.shape_cast %98 : vector<2xf32> to vector<2x1xf32>
    %100 = math.log %99 : vector<2x1xf32>
    %101 = arith.addf %100, %94 : vector<2x1xf32>
    %102 = vector.broadcast %101 : vector<2x1xf32> to vector<2x128xf32>
    %103 = arith.subf %92, %102 : vector<2x128xf32>
    %c1 = arith.constant 1 : index
    %c0_24 = arith.constant 0 : index
    %c0_25 = arith.constant 0 : index
    %104 = vector.load %arg4[%c1, %c0_24, %c0_25] : memref<8x2x128xf32, #tpu.memory_space<vmem>>, vector<1x2x128xf32>
    %105 = vector.shape_cast %104 : vector<1x2x128xf32> to vector<2x128xf32>
    %106 = vector.shape_cast %103 : vector<2x128xf32> to vector<1x2x128xf32>
    tpu.vector_store %arg4[%c1, %c0_24, %c0_25], %106 {strides = array<i32>} : memref<8x2x128xf32, #tpu.memory_space<vmem>>, vector<1x2x128xf32>,
    %107 = vector.broadcast %94 : vector<2x1xf32> to vector<2x128xf32>
    %108 = arith.cmpf oge, %92, %107 : vector<2x128xf32>
    %c128_i32_26 = arith.constant 128 : i32
    %109 = vector.broadcast %c128_i32_26 : i32 to vector<2x128xi32>
    %110 = arith.select %108, %5, %109 : vector<2x128xi1>, vector<2x128xi32>
    %cst_27 = arith.constant dense<2147483647> : vector<2xi32>
    %111 = vector.multi_reduction <minsi>, %110, %cst_27 [1] : vector<2x128xi32> to vector<2xi32>
    %112 = vector.shape_cast %111 : vector<2xi32> to vector<2x1xi32>
    %113 = vector.broadcast %112 : vector<2x1xi32> to vector<2x128xi32>
    %114 = arith.cmpi eq, %5, %113 : vector<2x128xi32>
    %115 = arith.extui %114 : vector<2x128xi1> to vector<2x128xi32>
    %116 = arith.sitofp %115 : vector<2x128xi32> to vector<2x128xf32>
    %117 = arith.truncf %116 : vector<2x128xf32> to vector<2x128xbf16>
    %118 = arith.truncf %89 : vector<2x128xf32> to vector<2x128xbf16>
    %119 = tpu.concatenate %117, %118 in 1 : vector<2x128xbf16>, vector<2x128xbf16> -> vector<2x256xbf16>
    %cst_28 = arith.constant dense<0.000000e+00> : vector<2x512xf32>
    %120 = tpu.matmul %119, %0, %cst_28 {dimension_numbers = #tpu.dot_dimension_numbers<[1], [0], [0], [1], [0, 0, 1, 1], [], []>} : vector<2x256xbf16>, vector<256x512xbf16>, vector<2x512xf32> -> vector<2x512xf32>
    %121 = vector.extract_strided_slice %120 {offsets = [0, 0], sizes = [2, 128], strides = [1, 1]} : vector<2x512xf32> to vector<2x128xf32>
    %122 = arith.negf %121 : vector<2x128xf32>
    %123 = math.exp %122 : vector<2x128xf32>
    %cst_29 = arith.constant 1.000000e+00 : f32
    %124 = vector.broadcast %cst_29 : f32 to vector<2x128xf32>
    %125 = arith.addf %124, %123 : vector<2x128xf32>
    %126 = arith.divf %124, %125 : vector<2x128xf32>
    %127 = vector.extract_strided_slice %120 {offsets = [0, 128], sizes = [2, 128], strides = [1, 1]} : vector<2x512xf32> to vector<2x128xf32>
    %128 = arith.negf %127 : vector<2x128xf32>
    %129 = math.exp %128 : vector<2x128xf32>
    %cst_30 = arith.constant 1.000000e+00 : f32
    %130 = vector.broadcast %cst_30 : f32 to vector<2x128xf32>
    %131 = arith.addf %130, %129 : vector<2x128xf32>
    %132 = arith.divf %130, %131 : vector<2x128xf32>
    %133 = vector.extract_strided_slice %120 {offsets = [0, 256], sizes = [2, 128], strides = [1, 1]} : vector<2x512xf32> to vector<2x128xf32>
    %134 = vector.extract_strided_slice %120 {offsets = [0, 384], sizes = [2, 128], strides = [1, 1]} : vector<2x512xf32> to vector<2x128xf32>
    %135 = arith.mulf %126, %134 : vector<2x128xf32>
    %136 = arith.addf %133, %135 : vector<2x128xf32>
    %137 = math.tanh %136 : vector<2x128xf32>
    %cst_31 = arith.constant 1.000000e+00 : f32
    %138 = vector.broadcast %cst_31 : f32 to vector<2x128xf32>
    %139 = arith.subf %138, %132 : vector<2x128xf32>
    %140 = arith.mulf %139, %137 : vector<2x128xf32>
    %141 = arith.mulf %132, %89 : vector<2x128xf32>
    %142 = arith.addf %140, %141 : vector<2x128xf32>
    %143 = arith.truncf %142 : vector<2x128xf32> to vector<2x128xbf16>
    %cst_32 = arith.constant dense<0.000000e+00> : vector<2x128xf32>
    %144 = tpu.matmul %143, %1, %cst_32 {dimension_numbers = #tpu.dot_dimension_numbers<[1], [0], [0], [1], [0, 0, 1, 1], [], []>} : vector<2x128xbf16>, vector<128x128xbf16>, vector<2x128xf32> -> vector<2x128xf32>
    %145 = arith.addf %144, %4 : vector<2x128xf32>
    %cst_33 = arith.constant dense<0xFF800000> : vector<2xf32>
    %146 = vector.multi_reduction <maximumf>, %145, %cst_33 [1] : vector<2x128xf32> to vector<2xf32>
    %147 = vector.shape_cast %146 : vector<2xf32> to vector<2x1xf32>
    %148 = vector.broadcast %147 : vector<2x1xf32> to vector<2x128xf32>
    %149 = arith.subf %145, %148 : vector<2x128xf32>
    %150 = math.exp %149 : vector<2x128xf32>
    %cst_34 = arith.constant dense<0.000000e+00> : vector<2xf32>
    %151 = vector.multi_reduction <add>, %150, %cst_34 [1] : vector<2x128xf32> to vector<2xf32>
    %152 = vector.shape_cast %151 : vector<2xf32> to vector<2x1xf32>
    %153 = math.log %152 : vector<2x1xf32>
    %154 = arith.addf %153, %147 : vector<2x1xf32>
    %155 = vector.broadcast %154 : vector<2x1xf32> to vector<2x128xf32>
    %156 = arith.subf %145, %155 : vector<2x128xf32>
    %c2 = arith.constant 2 : index
    %c0_35 = arith.constant 0 : index
    %c0_36 = arith.constant 0 : index
    %157 = vector.load %arg4[%c2, %c0_35, %c0_36] : memref<8x2x128xf32, #tpu.memory_space<vmem>>, vector<1x2x128xf32>
    %158 = vector.shape_cast %157 : vector<1x2x128xf32> to vector<2x128xf32>
    %159 = vector.shape_cast %156 : vector<2x128xf32> to vector<1x2x128xf32>
    tpu.vector_store %arg4[%c2, %c0_35, %c0_36], %159 {strides = array<i32>} : memref<8x2x128xf32, #tpu.memory_space<vmem>>, vector<1x2x128xf32>,
    %160 = vector.broadcast %147 : vector<2x1xf32> to vector<2x128xf32>
    %161 = arith.cmpf oge, %145, %160 : vector<2x128xf32>
    %c128_i32_37 = arith.constant 128 : i32
    %162 = vector.broadcast %c128_i32_37 : i32 to vector<2x128xi32>
    %163 = arith.select %161, %5, %162 : vector<2x128xi1>, vector<2x128xi32>
    %cst_38 = arith.constant dense<2147483647> : vector<2xi32>
    %164 = vector.multi_reduction <minsi>, %163, %cst_38 [1] : vector<2x128xi32> to vector<2xi32>
    %165 = vector.shape_cast %164 : vector<2xi32> to vector<2x1xi32>
    %166 = vector.broadcast %165 : vector<2x1xi32> to vector<2x128xi32>
    %167 = arith.cmpi eq, %5, %166 : vector<2x128xi32>
    %168 = arith.extui %167 : vector<2x128xi1> to vector<2x128xi32>
    %169 = arith.sitofp %168 : vector<2x128xi32> to vector<2x128xf32>
    %170 = arith.truncf %169 : vector<2x128xf32> to vector<2x128xbf16>
    %171 = arith.truncf %142 : vector<2x128xf32> to vector<2x128xbf16>
    %172 = tpu.concatenate %170, %171 in 1 : vector<2x128xbf16>, vector<2x128xbf16> -> vector<2x256xbf16>
    %cst_39 = arith.constant dense<0.000000e+00> : vector<2x512xf32>
    %173 = tpu.matmul %172, %0, %cst_39 {dimension_numbers = #tpu.dot_dimension_numbers<[1], [0], [0], [1], [0, 0, 1, 1], [], []>} : vector<2x256xbf16>, vector<256x512xbf16>, vector<2x512xf32> -> vector<2x512xf32>
    %174 = vector.extract_strided_slice %173 {offsets = [0, 0], sizes = [2, 128], strides = [1, 1]} : vector<2x512xf32> to vector<2x128xf32>
    %175 = arith.negf %174 : vector<2x128xf32>
    %176 = math.exp %175 : vector<2x128xf32>
    %cst_40 = arith.constant 1.000000e+00 : f32
    %177 = vector.broadcast %cst_40 : f32 to vector<2x128xf32>
    %178 = arith.addf %177, %176 : vector<2x128xf32>
    %179 = arith.divf %177, %178 : vector<2x128xf32>
    %180 = vector.extract_strided_slice %173 {offsets = [0, 128], sizes = [2, 128], strides = [1, 1]} : vector<2x512xf32> to vector<2x128xf32>
    %181 = arith.negf %180 : vector<2x128xf32>
    %182 = math.exp %181 : vector<2x128xf32>
    %cst_41 = arith.constant 1.000000e+00 : f32
    %183 = vector.broadcast %cst_41 : f32 to vector<2x128xf32>
    %184 = arith.addf %183, %182 : vector<2x128xf32>
    %185 = arith.divf %183, %184 : vector<2x128xf32>
    %186 = vector.extract_strided_slice %173 {offsets = [0, 256], sizes = [2, 128], strides = [1, 1]} : vector<2x512xf32> to vector<2x128xf32>
    %187 = vector.extract_strided_slice %173 {offsets = [0, 384], sizes = [2, 128], strides = [1, 1]} : vector<2x512xf32> to vector<2x128xf32>
    %188 = arith.mulf %179, %187 : vector<2x128xf32>
    %189 = arith.addf %186, %188 : vector<2x128xf32>
    %190 = math.tanh %189 : vector<2x128xf32>
    %cst_42 = arith.constant 1.000000e+00 : f32
    %191 = vector.broadcast %cst_42 : f32 to vector<2x128xf32>
    %192 = arith.subf %191, %185 : vector<2x128xf32>
    %193 = arith.mulf %192, %190 : vector<2x128xf32>
    %194 = arith.mulf %185, %142 : vector<2x128xf32>
    %195 = arith.addf %193, %194 : vector<2x128xf32>
    %196 = arith.truncf %195 : vector<2x128xf32> to vector<2x128xbf16>
    %cst_43 = arith.constant dense<0.000000e+00> : vector<2x128xf32>
    %197 = tpu.matmul %196, %1, %cst_43 {dimension_numbers = #tpu.dot_dimension_numbers<[1], [0], [0], [1], [0, 0, 1, 1], [], []>} : vector<2x128xbf16>, vector<128x128xbf16>, vector<2x128xf32> -> vector<2x128xf32>
    %198 = arith.addf %197, %4 : vector<2x128xf32>
    %cst_44 = arith.constant dense<0xFF800000> : vector<2xf32>
    %199 = vector.multi_reduction <maximumf>, %198, %cst_44 [1] : vector<2x128xf32> to vector<2xf32>
    %200 = vector.shape_cast %199 : vector<2xf32> to vector<2x1xf32>
    %201 = vector.broadcast %200 : vector<2x1xf32> to vector<2x128xf32>
    %202 = arith.subf %198, %201 : vector<2x128xf32>
    %203 = math.exp %202 : vector<2x128xf32>
    %cst_45 = arith.constant dense<0.000000e+00> : vector<2xf32>
    %204 = vector.multi_reduction <add>, %203, %cst_45 [1] : vector<2x128xf32> to vector<2xf32>
    %205 = vector.shape_cast %204 : vector<2xf32> to vector<2x1xf32>
    %206 = math.log %205 : vector<2x1xf32>
    %207 = arith.addf %206, %200 : vector<2x1xf32>
    %208 = vector.broadcast %207 : vector<2x1xf32> to vector<2x128xf32>
    %209 = arith.subf %198, %208 : vector<2x128xf32>
    %c3 = arith.constant 3 : index
    %c0_46 = arith.constant 0 : index
    %c0_47 = arith.constant 0 : index
    %210 = vector.load %arg4[%c3, %c0_46, %c0_47] : memref<8x2x128xf32, #tpu.memory_space<vmem>>, vector<1x2x128xf32>
    %211 = vector.shape_cast %210 : vector<1x2x128xf32> to vector<2x128xf32>
    %212 = vector.shape_cast %209 : vector<2x128xf32> to vector<1x2x128xf32>
    tpu.vector_store %arg4[%c3, %c0_46, %c0_47], %212 {strides = array<i32>} : memref<8x2x128xf32, #tpu.memory_space<vmem>>, vector<1x2x128xf32>,
    %213 = vector.broadcast %200 : vector<2x1xf32> to vector<2x128xf32>
    %214 = arith.cmpf oge, %198, %213 : vector<2x128xf32>
    %c128_i32_48 = arith.constant 128 : i32
    %215 = vector.broadcast %c128_i32_48 : i32 to vector<2x128xi32>
    %216 = arith.select %214, %5, %215 : vector<2x128xi1>, vector<2x128xi32>
    %cst_49 = arith.constant dense<2147483647> : vector<2xi32>
    %217 = vector.multi_reduction <minsi>, %216, %cst_49 [1] : vector<2x128xi32> to vector<2xi32>
    %218 = vector.shape_cast %217 : vector<2xi32> to vector<2x1xi32>
    %219 = vector.broadcast %218 : vector<2x1xi32> to vector<2x128xi32>
    %220 = arith.cmpi eq, %5, %219 : vector<2x128xi32>
    %221 = arith.extui %220 : vector<2x128xi1> to vector<2x128xi32>
    %222 = arith.sitofp %221 : vector<2x128xi32> to vector<2x128xf32>
    %223 = arith.truncf %222 : vector<2x128xf32> to vector<2x128xbf16>
    %224 = arith.truncf %195 : vector<2x128xf32> to vector<2x128xbf16>
    %225 = tpu.concatenate %223, %224 in 1 : vector<2x128xbf16>, vector<2x128xbf16> -> vector<2x256xbf16>
    %cst_50 = arith.constant dense<0.000000e+00> : vector<2x512xf32>
    %226 = tpu.matmul %225, %0, %cst_50 {dimension_numbers = #tpu.dot_dimension_numbers<[1], [0], [0], [1], [0, 0, 1, 1], [], []>} : vector<2x256xbf16>, vector<256x512xbf16>, vector<2x512xf32> -> vector<2x512xf32>
    %227 = vector.extract_strided_slice %226 {offsets = [0, 0], sizes = [2, 128], strides = [1, 1]} : vector<2x512xf32> to vector<2x128xf32>
    %228 = arith.negf %227 : vector<2x128xf32>
    %229 = math.exp %228 : vector<2x128xf32>
    %cst_51 = arith.constant 1.000000e+00 : f32
    %230 = vector.broadcast %cst_51 : f32 to vector<2x128xf32>
    %231 = arith.addf %230, %229 : vector<2x128xf32>
    %232 = arith.divf %230, %231 : vector<2x128xf32>
    %233 = vector.extract_strided_slice %226 {offsets = [0, 128], sizes = [2, 128], strides = [1, 1]} : vector<2x512xf32> to vector<2x128xf32>
    %234 = arith.negf %233 : vector<2x128xf32>
    %235 = math.exp %234 : vector<2x128xf32>
    %cst_52 = arith.constant 1.000000e+00 : f32
    %236 = vector.broadcast %cst_52 : f32 to vector<2x128xf32>
    %237 = arith.addf %236, %235 : vector<2x128xf32>
    %238 = arith.divf %236, %237 : vector<2x128xf32>
    %239 = vector.extract_strided_slice %226 {offsets = [0, 256], sizes = [2, 128], strides = [1, 1]} : vector<2x512xf32> to vector<2x128xf32>
    %240 = vector.extract_strided_slice %226 {offsets = [0, 384], sizes = [2, 128], strides = [1, 1]} : vector<2x512xf32> to vector<2x128xf32>
    %241 = arith.mulf %232, %240 : vector<2x128xf32>
    %242 = arith.addf %239, %241 : vector<2x128xf32>
    %243 = math.tanh %242 : vector<2x128xf32>
    %cst_53 = arith.constant 1.000000e+00 : f32
    %244 = vector.broadcast %cst_53 : f32 to vector<2x128xf32>
    %245 = arith.subf %244, %238 : vector<2x128xf32>
    %246 = arith.mulf %245, %243 : vector<2x128xf32>
    %247 = arith.mulf %238, %195 : vector<2x128xf32>
    %248 = arith.addf %246, %247 : vector<2x128xf32>
    %249 = arith.truncf %248 : vector<2x128xf32> to vector<2x128xbf16>
    %cst_54 = arith.constant dense<0.000000e+00> : vector<2x128xf32>
    %250 = tpu.matmul %249, %1, %cst_54 {dimension_numbers = #tpu.dot_dimension_numbers<[1], [0], [0], [1], [0, 0, 1, 1], [], []>} : vector<2x128xbf16>, vector<128x128xbf16>, vector<2x128xf32> -> vector<2x128xf32>
    %251 = arith.addf %250, %4 : vector<2x128xf32>
    %cst_55 = arith.constant dense<0xFF800000> : vector<2xf32>
    %252 = vector.multi_reduction <maximumf>, %251, %cst_55 [1] : vector<2x128xf32> to vector<2xf32>
    %253 = vector.shape_cast %252 : vector<2xf32> to vector<2x1xf32>
    %254 = vector.broadcast %253 : vector<2x1xf32> to vector<2x128xf32>
    %255 = arith.subf %251, %254 : vector<2x128xf32>
    %256 = math.exp %255 : vector<2x128xf32>
    %cst_56 = arith.constant dense<0.000000e+00> : vector<2xf32>
    %257 = vector.multi_reduction <add>, %256, %cst_56 [1] : vector<2x128xf32> to vector<2xf32>
    %258 = vector.shape_cast %257 : vector<2xf32> to vector<2x1xf32>
    %259 = math.log %258 : vector<2x1xf32>
    %260 = arith.addf %259, %253 : vector<2x1xf32>
    %261 = vector.broadcast %260 : vector<2x1xf32> to vector<2x128xf32>
    %262 = arith.subf %251, %261 : vector<2x128xf32>
    %c4 = arith.constant 4 : index
    %c0_57 = arith.constant 0 : index
    %c0_58 = arith.constant 0 : index
    %263 = vector.load %arg4[%c4, %c0_57, %c0_58] : memref<8x2x128xf32, #tpu.memory_space<vmem>>, vector<1x2x128xf32>
    %264 = vector.shape_cast %263 : vector<1x2x128xf32> to vector<2x128xf32>
    %265 = vector.shape_cast %262 : vector<2x128xf32> to vector<1x2x128xf32>
    tpu.vector_store %arg4[%c4, %c0_57, %c0_58], %265 {strides = array<i32>} : memref<8x2x128xf32, #tpu.memory_space<vmem>>, vector<1x2x128xf32>,
    %266 = vector.broadcast %253 : vector<2x1xf32> to vector<2x128xf32>
    %267 = arith.cmpf oge, %251, %266 : vector<2x128xf32>
    %c128_i32_59 = arith.constant 128 : i32
    %268 = vector.broadcast %c128_i32_59 : i32 to vector<2x128xi32>
    %269 = arith.select %267, %5, %268 : vector<2x128xi1>, vector<2x128xi32>
    %cst_60 = arith.constant dense<2147483647> : vector<2xi32>
    %270 = vector.multi_reduction <minsi>, %269, %cst_60 [1] : vector<2x128xi32> to vector<2xi32>
    %271 = vector.shape_cast %270 : vector<2xi32> to vector<2x1xi32>
    %272 = vector.broadcast %271 : vector<2x1xi32> to vector<2x128xi32>
    %273 = arith.cmpi eq, %5, %272 : vector<2x128xi32>
    %274 = arith.extui %273 : vector<2x128xi1> to vector<2x128xi32>
    %275 = arith.sitofp %274 : vector<2x128xi32> to vector<2x128xf32>
    %276 = arith.truncf %275 : vector<2x128xf32> to vector<2x128xbf16>
    %277 = arith.truncf %248 : vector<2x128xf32> to vector<2x128xbf16>
    %278 = tpu.concatenate %276, %277 in 1 : vector<2x128xbf16>, vector<2x128xbf16> -> vector<2x256xbf16>
    %cst_61 = arith.constant dense<0.000000e+00> : vector<2x512xf32>
    %279 = tpu.matmul %278, %0, %cst_61 {dimension_numbers = #tpu.dot_dimension_numbers<[1], [0], [0], [1], [0, 0, 1, 1], [], []>} : vector<2x256xbf16>, vector<256x512xbf16>, vector<2x512xf32> -> vector<2x512xf32>
    %280 = vector.extract_strided_slice %279 {offsets = [0, 0], sizes = [2, 128], strides = [1, 1]} : vector<2x512xf32> to vector<2x128xf32>
    %281 = arith.negf %280 : vector<2x128xf32>
    %282 = math.exp %281 : vector<2x128xf32>
    %cst_62 = arith.constant 1.000000e+00 : f32
    %283 = vector.broadcast %cst_62 : f32 to vector<2x128xf32>
    %284 = arith.addf %283, %282 : vector<2x128xf32>
    %285 = arith.divf %283, %284 : vector<2x128xf32>
    %286 = vector.extract_strided_slice %279 {offsets = [0, 128], sizes = [2, 128], strides = [1, 1]} : vector<2x512xf32> to vector<2x128xf32>
    %287 = arith.negf %286 : vector<2x128xf32>
    %288 = math.exp %287 : vector<2x128xf32>
    %cst_63 = arith.constant 1.000000e+00 : f32
    %289 = vector.broadcast %cst_63 : f32 to vector<2x128xf32>
    %290 = arith.addf %289, %288 : vector<2x128xf32>
    %291 = arith.divf %289, %290 : vector<2x128xf32>
    %292 = vector.extract_strided_slice %279 {offsets = [0, 256], sizes = [2, 128], strides = [1, 1]} : vector<2x512xf32> to vector<2x128xf32>
    %293 = vector.extract_strided_slice %279 {offsets = [0, 384], sizes = [2, 128], strides = [1, 1]} : vector<2x512xf32> to vector<2x128xf32>
    %294 = arith.mulf %285, %293 : vector<2x128xf32>
    %295 = arith.addf %292, %294 : vector<2x128xf32>
    %296 = math.tanh %295 : vector<2x128xf32>
    %cst_64 = arith.constant 1.000000e+00 : f32
    %297 = vector.broadcast %cst_64 : f32 to vector<2x128xf32>
    %298 = arith.subf %297, %291 : vector<2x128xf32>
    %299 = arith.mulf %298, %296 : vector<2x128xf32>
    %300 = arith.mulf %291, %248 : vector<2x128xf32>
    %301 = arith.addf %299, %300 : vector<2x128xf32>
    %302 = arith.truncf %301 : vector<2x128xf32> to vector<2x128xbf16>
    %cst_65 = arith.constant dense<0.000000e+00> : vector<2x128xf32>
    %303 = tpu.matmul %302, %1, %cst_65 {dimension_numbers = #tpu.dot_dimension_numbers<[1], [0], [0], [1], [0, 0, 1, 1], [], []>} : vector<2x128xbf16>, vector<128x128xbf16>, vector<2x128xf32> -> vector<2x128xf32>
    %304 = arith.addf %303, %4 : vector<2x128xf32>
    %cst_66 = arith.constant dense<0xFF800000> : vector<2xf32>
    %305 = vector.multi_reduction <maximumf>, %304, %cst_66 [1] : vector<2x128xf32> to vector<2xf32>
    %306 = vector.shape_cast %305 : vector<2xf32> to vector<2x1xf32>
    %307 = vector.broadcast %306 : vector<2x1xf32> to vector<2x128xf32>
    %308 = arith.subf %304, %307 : vector<2x128xf32>
    %309 = math.exp %308 : vector<2x128xf32>
    %cst_67 = arith.constant dense<0.000000e+00> : vector<2xf32>
    %310 = vector.multi_reduction <add>, %309, %cst_67 [1] : vector<2x128xf32> to vector<2xf32>
    %311 = vector.shape_cast %310 : vector<2xf32> to vector<2x1xf32>
    %312 = math.log %311 : vector<2x1xf32>
    %313 = arith.addf %312, %306 : vector<2x1xf32>
    %314 = vector.broadcast %313 : vector<2x1xf32> to vector<2x128xf32>
    %315 = arith.subf %304, %314 : vector<2x128xf32>
    %c5 = arith.constant 5 : index
    %c0_68 = arith.constant 0 : index
    %c0_69 = arith.constant 0 : index
    %316 = vector.load %arg4[%c5, %c0_68, %c0_69] : memref<8x2x128xf32, #tpu.memory_space<vmem>>, vector<1x2x128xf32>
    %317 = vector.shape_cast %316 : vector<1x2x128xf32> to vector<2x128xf32>
    %318 = vector.shape_cast %315 : vector<2x128xf32> to vector<1x2x128xf32>
    tpu.vector_store %arg4[%c5, %c0_68, %c0_69], %318 {strides = array<i32>} : memref<8x2x128xf32, #tpu.memory_space<vmem>>, vector<1x2x128xf32>,
    %319 = vector.broadcast %306 : vector<2x1xf32> to vector<2x128xf32>
    %320 = arith.cmpf oge, %304, %319 : vector<2x128xf32>
    %c128_i32_70 = arith.constant 128 : i32
    %321 = vector.broadcast %c128_i32_70 : i32 to vector<2x128xi32>
    %322 = arith.select %320, %5, %321 : vector<2x128xi1>, vector<2x128xi32>
    %cst_71 = arith.constant dense<2147483647> : vector<2xi32>
    %323 = vector.multi_reduction <minsi>, %322, %cst_71 [1] : vector<2x128xi32> to vector<2xi32>
    %324 = vector.shape_cast %323 : vector<2xi32> to vector<2x1xi32>
    %325 = vector.broadcast %324 : vector<2x1xi32> to vector<2x128xi32>
    %326 = arith.cmpi eq, %5, %325 : vector<2x128xi32>
    %327 = arith.extui %326 : vector<2x128xi1> to vector<2x128xi32>
    %328 = arith.sitofp %327 : vector<2x128xi32> to vector<2x128xf32>
    %329 = arith.truncf %328 : vector<2x128xf32> to vector<2x128xbf16>
    %330 = arith.truncf %301 : vector<2x128xf32> to vector<2x128xbf16>
    %331 = tpu.concatenate %329, %330 in 1 : vector<2x128xbf16>, vector<2x128xbf16> -> vector<2x256xbf16>
    %cst_72 = arith.constant dense<0.000000e+00> : vector<2x512xf32>
    %332 = tpu.matmul %331, %0, %cst_72 {dimension_numbers = #tpu.dot_dimension_numbers<[1], [0], [0], [1], [0, 0, 1, 1], [], []>} : vector<2x256xbf16>, vector<256x512xbf16>, vector<2x512xf32> -> vector<2x512xf32>
    %333 = vector.extract_strided_slice %332 {offsets = [0, 0], sizes = [2, 128], strides = [1, 1]} : vector<2x512xf32> to vector<2x128xf32>
    %334 = arith.negf %333 : vector<2x128xf32>
    %335 = math.exp %334 : vector<2x128xf32>
    %cst_73 = arith.constant 1.000000e+00 : f32
    %336 = vector.broadcast %cst_73 : f32 to vector<2x128xf32>
    %337 = arith.addf %336, %335 : vector<2x128xf32>
    %338 = arith.divf %336, %337 : vector<2x128xf32>
    %339 = vector.extract_strided_slice %332 {offsets = [0, 128], sizes = [2, 128], strides = [1, 1]} : vector<2x512xf32> to vector<2x128xf32>
    %340 = arith.negf %339 : vector<2x128xf32>
    %341 = math.exp %340 : vector<2x128xf32>
    %cst_74 = arith.constant 1.000000e+00 : f32
    %342 = vector.broadcast %cst_74 : f32 to vector<2x128xf32>
    %343 = arith.addf %342, %341 : vector<2x128xf32>
    %344 = arith.divf %342, %343 : vector<2x128xf32>
    %345 = vector.extract_strided_slice %332 {offsets = [0, 256], sizes = [2, 128], strides = [1, 1]} : vector<2x512xf32> to vector<2x128xf32>
    %346 = vector.extract_strided_slice %332 {offsets = [0, 384], sizes = [2, 128], strides = [1, 1]} : vector<2x512xf32> to vector<2x128xf32>
    %347 = arith.mulf %338, %346 : vector<2x128xf32>
    %348 = arith.addf %345, %347 : vector<2x128xf32>
    %349 = math.tanh %348 : vector<2x128xf32>
    %cst_75 = arith.constant 1.000000e+00 : f32
    %350 = vector.broadcast %cst_75 : f32 to vector<2x128xf32>
    %351 = arith.subf %350, %344 : vector<2x128xf32>
    %352 = arith.mulf %351, %349 : vector<2x128xf32>
    %353 = arith.mulf %344, %301 : vector<2x128xf32>
    %354 = arith.addf %352, %353 : vector<2x128xf32>
    %355 = arith.truncf %354 : vector<2x128xf32> to vector<2x128xbf16>
    %cst_76 = arith.constant dense<0.000000e+00> : vector<2x128xf32>
    %356 = tpu.matmul %355, %1, %cst_76 {dimension_numbers = #tpu.dot_dimension_numbers<[1], [0], [0], [1], [0, 0, 1, 1], [], []>} : vector<2x128xbf16>, vector<128x128xbf16>, vector<2x128xf32> -> vector<2x128xf32>
    %357 = arith.addf %356, %4 : vector<2x128xf32>
    %cst_77 = arith.constant dense<0xFF800000> : vector<2xf32>
    %358 = vector.multi_reduction <maximumf>, %357, %cst_77 [1] : vector<2x128xf32> to vector<2xf32>
    %359 = vector.shape_cast %358 : vector<2xf32> to vector<2x1xf32>
    %360 = vector.broadcast %359 : vector<2x1xf32> to vector<2x128xf32>
    %361 = arith.subf %357, %360 : vector<2x128xf32>
    %362 = math.exp %361 : vector<2x128xf32>
    %cst_78 = arith.constant dense<0.000000e+00> : vector<2xf32>
    %363 = vector.multi_reduction <add>, %362, %cst_78 [1] : vector<2x128xf32> to vector<2xf32>
    %364 = vector.shape_cast %363 : vector<2xf32> to vector<2x1xf32>
    %365 = math.log %364 : vector<2x1xf32>
    %366 = arith.addf %365, %359 : vector<2x1xf32>
    %367 = vector.broadcast %366 : vector<2x1xf32> to vector<2x128xf32>
    %368 = arith.subf %357, %367 : vector<2x128xf32>
    %c6 = arith.constant 6 : index
    %c0_79 = arith.constant 0 : index
    %c0_80 = arith.constant 0 : index
    %369 = vector.load %arg4[%c6, %c0_79, %c0_80] : memref<8x2x128xf32, #tpu.memory_space<vmem>>, vector<1x2x128xf32>
    %370 = vector.shape_cast %369 : vector<1x2x128xf32> to vector<2x128xf32>
    %371 = vector.shape_cast %368 : vector<2x128xf32> to vector<1x2x128xf32>
    tpu.vector_store %arg4[%c6, %c0_79, %c0_80], %371 {strides = array<i32>} : memref<8x2x128xf32, #tpu.memory_space<vmem>>, vector<1x2x128xf32>,
    %372 = vector.broadcast %359 : vector<2x1xf32> to vector<2x128xf32>
    %373 = arith.cmpf oge, %357, %372 : vector<2x128xf32>
    %c128_i32_81 = arith.constant 128 : i32
    %374 = vector.broadcast %c128_i32_81 : i32 to vector<2x128xi32>
    %375 = arith.select %373, %5, %374 : vector<2x128xi1>, vector<2x128xi32>
    %cst_82 = arith.constant dense<2147483647> : vector<2xi32>
    %376 = vector.multi_reduction <minsi>, %375, %cst_82 [1] : vector<2x128xi32> to vector<2xi32>
    %377 = vector.shape_cast %376 : vector<2xi32> to vector<2x1xi32>
    %378 = vector.broadcast %377 : vector<2x1xi32> to vector<2x128xi32>
    %379 = arith.cmpi eq, %5, %378 : vector<2x128xi32>
    %380 = arith.extui %379 : vector<2x128xi1> to vector<2x128xi32>
    %381 = arith.sitofp %380 : vector<2x128xi32> to vector<2x128xf32>
    %382 = arith.truncf %381 : vector<2x128xf32> to vector<2x128xbf16>
    %383 = arith.truncf %354 : vector<2x128xf32> to vector<2x128xbf16>
    %384 = tpu.concatenate %382, %383 in 1 : vector<2x128xbf16>, vector<2x128xbf16> -> vector<2x256xbf16>
    %cst_83 = arith.constant dense<0.000000e+00> : vector<2x512xf32>
    %385 = tpu.matmul %384, %0, %cst_83 {dimension_numbers = #tpu.dot_dimension_numbers<[1], [0], [0], [1], [0, 0, 1, 1], [], []>} : vector<2x256xbf16>, vector<256x512xbf16>, vector<2x512xf32> -> vector<2x512xf32>
    %386 = vector.extract_strided_slice %385 {offsets = [0, 0], sizes = [2, 128], strides = [1, 1]} : vector<2x512xf32> to vector<2x128xf32>
    %387 = arith.negf %386 : vector<2x128xf32>
    %388 = math.exp %387 : vector<2x128xf32>
    %cst_84 = arith.constant 1.000000e+00 : f32
    %389 = vector.broadcast %cst_84 : f32 to vector<2x128xf32>
    %390 = arith.addf %389, %388 : vector<2x128xf32>
    %391 = arith.divf %389, %390 : vector<2x128xf32>
    %392 = vector.extract_strided_slice %385 {offsets = [0, 128], sizes = [2, 128], strides = [1, 1]} : vector<2x512xf32> to vector<2x128xf32>
    %393 = arith.negf %392 : vector<2x128xf32>
    %394 = math.exp %393 : vector<2x128xf32>
    %cst_85 = arith.constant 1.000000e+00 : f32
    %395 = vector.broadcast %cst_85 : f32 to vector<2x128xf32>
    %396 = arith.addf %395, %394 : vector<2x128xf32>
    %397 = arith.divf %395, %396 : vector<2x128xf32>
    %398 = vector.extract_strided_slice %385 {offsets = [0, 256], sizes = [2, 128], strides = [1, 1]} : vector<2x512xf32> to vector<2x128xf32>
    %399 = vector.extract_strided_slice %385 {offsets = [0, 384], sizes = [2, 128], strides = [1, 1]} : vector<2x512xf32> to vector<2x128xf32>
    %400 = arith.mulf %391, %399 : vector<2x128xf32>
    %401 = arith.addf %398, %400 : vector<2x128xf32>
    %402 = math.tanh %401 : vector<2x128xf32>
    %cst_86 = arith.constant 1.000000e+00 : f32
    %403 = vector.broadcast %cst_86 : f32 to vector<2x128xf32>
    %404 = arith.subf %403, %397 : vector<2x128xf32>
    %405 = arith.mulf %404, %402 : vector<2x128xf32>
    %406 = arith.mulf %397, %354 : vector<2x128xf32>
    %407 = arith.addf %405, %406 : vector<2x128xf32>
    %408 = arith.truncf %407 : vector<2x128xf32> to vector<2x128xbf16>
    %cst_87 = arith.constant dense<0.000000e+00> : vector<2x128xf32>
    %409 = tpu.matmul %408, %1, %cst_87 {dimension_numbers = #tpu.dot_dimension_numbers<[1], [0], [0], [1], [0, 0, 1, 1], [], []>} : vector<2x128xbf16>, vector<128x128xbf16>, vector<2x128xf32> -> vector<2x128xf32>
    %410 = arith.addf %409, %4 : vector<2x128xf32>
    %cst_88 = arith.constant dense<0xFF800000> : vector<2xf32>
    %411 = vector.multi_reduction <maximumf>, %410, %cst_88 [1] : vector<2x128xf32> to vector<2xf32>
    %412 = vector.shape_cast %411 : vector<2xf32> to vector<2x1xf32>
    %413 = vector.broadcast %412 : vector<2x1xf32> to vector<2x128xf32>
    %414 = arith.subf %410, %413 : vector<2x128xf32>
    %415 = math.exp %414 : vector<2x128xf32>
    %cst_89 = arith.constant dense<0.000000e+00> : vector<2xf32>
    %416 = vector.multi_reduction <add>, %415, %cst_89 [1] : vector<2x128xf32> to vector<2xf32>
    %417 = vector.shape_cast %416 : vector<2xf32> to vector<2x1xf32>
    %418 = math.log %417 : vector<2x1xf32>
    %419 = arith.addf %418, %412 : vector<2x1xf32>
    %420 = vector.broadcast %419 : vector<2x1xf32> to vector<2x128xf32>
    %421 = arith.subf %410, %420 : vector<2x128xf32>
    %c7 = arith.constant 7 : index
    %c0_90 = arith.constant 0 : index
    %c0_91 = arith.constant 0 : index
    %422 = vector.load %arg4[%c7, %c0_90, %c0_91] : memref<8x2x128xf32, #tpu.memory_space<vmem>>, vector<1x2x128xf32>
    %423 = vector.shape_cast %422 : vector<1x2x128xf32> to vector<2x128xf32>
    %424 = vector.shape_cast %421 : vector<2x128xf32> to vector<1x2x128xf32>
    tpu.vector_store %arg4[%c7, %c0_90, %c0_91], %424 {strides = array<i32>} : memref<8x2x128xf32, #tpu.memory_space<vmem>>, vector<1x2x128xf32>,
    %c0_92 = arith.constant 0 : index
    %c0_93 = arith.constant 0 : index
    %425 = vector.load %arg5[%c0_92, %c0_93] : memref<2x128xf32, #tpu.memory_space<vmem>>, vector<2x128xf32>
    tpu.vector_store %arg5[%c0_92, %c0_93], %407 {strides = array<i32>} : memref<2x128xf32, #tpu.memory_space<vmem>>, vector<2x128xf32>,
    return
  }
}

</mosaic_0001>

<llo_original>
// kernel: tpu_custom_call.1
$region0: #{tpu_custom_call.1}
  #allocation0 [shape = 'u32[]', space=smem, size = 0x4, offset = 0x4, fixed_abs, tag = 'smem constant byte address 0x4 - core index']
  #allocation1 [shape = 'u32[72,128]{1,0:T(1,128)}', space=vmem, size = 0x9000, scoped, tag = 'internal scratch']
  %s0 = inlined_call_operand.hbm [shape: bf16[256,512], index: 0, kind: input, shape index: {}]
  %s1 = inlined_call_operand.hbm [shape: bf16[128,128], index: 1, kind: input, shape index: {}]
  %s2 = inlined_call_operand.hbm [shape: f32[1,128], index: 2, kind: input, shape index: {}]
  %s3 = inlined_call_operand.vmem [shape: f32[2,128], index: 3, kind: input, shape index: {}]
  %s4 = inlined_call_operand.hbm [shape: f32[8,2,128], index: 4, kind: output, shape index: {0}]
  %s5 = inlined_call_operand.hbm [shape: f32[2,128], index: 5, kind: output, shape index: {1}]
  %6 = xla_tuple %s4, %s5
  %s7 = sld [smem:[#allocation0]]
  $region46: #{tpu_custom_call.1} parent=0
    _
  %s9 = ssub.s32 1, %s7
  %s10 = scalar_select 0, %s9, %s7
  $region1: #{tpu_custom_call.1} parent=0
    #allocation2 [shape = 'u8[262144]{0}', space=vmem, size = 0x40000, scoped, tag = 'input window, operand 0, single buffered']
    #allocation3 [shape = 's32[1]{0}', space=sflag, size = 0x4, scoped, tag = 'scoped memory for tpu_custom_call.1']
    #allocation4 [shape = 's32[1]{0}', space=sflag, size = 0x4, scoped, tag = 'scoped memory for tpu_custom_call.1']
    #allocation5 [shape = 'u8[32768]{0}', space=vmem, size = 0x8000, scoped, tag = 'input window, operand 1, single buffered']
    #allocation6 [shape = 's32[1]{0}', space=sflag, size = 0x4, scoped, tag = 'scoped memory for tpu_custom_call.1']
    #allocation7 [shape = 'u8[512]{0}', space=vmem, size = 0x400, scoped, tag = 'input window, operand 2, single buffered']
    #allocation8 [shape = 'u8[8192]{0}', space=vmem, size = 0x2000, scoped, tag = 'output window, operand 0, single buffered']
    #allocation9 [shape = 'u8[1024]{0}', space=vmem, size = 0x400, scoped, tag = 'output window, operand 1, single buffered']
    #allocation10 [shape = 's32[1]{0}', space=sflag, size = 0x4, scoped, tag = 'scoped memory for tpu_custom_call.1']
    %11 = vsyncpa [#allocation3], 0
    %12 = vsyncpa [#allocation6], 0
    %13 = vsyncpa [#allocation4], 0
    %14 = vsyncpa [#allocation10], 0
    // Predicated region
    $region2: #{tpu_custom_call.1} parent=1 // pred_check
      _
    $region3: #{tpu_custom_call.1} parent=1 // pred_check_branch
      %16 = sbr.rel (0) target = $region5
    $region4: #{tpu_custom_call.1} parent=1 // pred_region
      %18 = vsyncadd [#allocation3], 0
      %s19 = sshll.u32 %s0, 4
      %s20 = int_to_ptr.hbm [resolvable:$true] %s19
      %s21 = sshll.u32 [#allocation2], 4
      %s22 = int_to_ptr.vmem [resolvable:$true] %s21
      %27 = dma.hbm_to_vmem [thread:$0]  %s20, 8192, %s22, [#allocation3], 256, 256, 16
    $region5: #{tpu_custom_call.1} parent=1 // pred_fallthru
      _
    // Predicated region
    $region6: #{tpu_custom_call.1} parent=1 // pred_check
      _
    $region7: #{tpu_custom_call.1} parent=1 // pred_check_branch
      %29 = sbr.rel (0) target = $region9
    $region8: #{tpu_custom_call.1} parent=1 // pred_region
      %31 = vsyncadd [#allocation6], 0
      %s32 = sshll.u32 %s1, 4
      %s33 = int_to_ptr.hbm [resolvable:$true] %s32
      %s34 = sshll.u32 [#allocation5], 4
      %s35 = int_to_ptr.vmem [resolvable:$true] %s34
      %40 = dma.hbm_to_vmem [thread:$0]  %s33, 1024, %s35, [#allocation6], 64, 64, 4
    $region9: #{tpu_custom_call.1} parent=1 // pred_fallthru
      _
    // Predicated region
    $region10: #{tpu_custom_call.1} parent=1 // pred_check
      _
    $region11: #{tpu_custom_call.1} parent=1 // pred_check_branch
      %42 = sbr.rel (0) target = $region13
    $region12: #{tpu_custom_call.1} parent=1 // pred_region
      %44 = vsyncadd [#allocation6], 0
      %s46 = sshll.u32 %s2, 4
      %s47 = int_to_ptr.hbm [resolvable:$true] %s46
      %s48 = sshll.u32 [#allocation7], 4
      %s49 = int_to_ptr.vmem [resolvable:$true] %s48
      %51 = dma.hbm_to_vmem [thread:$0]  %s47, 16, %s49, [#allocation6]
    $region13: #{tpu_custom_call.1} parent=1 // pred_fallthru
      _
    // Predicated region
    $region14: #{tpu_custom_call.1} parent=1 // pred_check
      _
    $region15: #{tpu_custom_call.1} parent=1 // pred_check_branch
      %53 = sbr.rel (0) target = $region17
    $region16: #{tpu_custom_call.1} parent=1 // pred_region
      _
    $region17: #{tpu_custom_call.1} parent=1 // pred_fallthru
      _
    // Predicated region
    $region18: #{tpu_custom_call.1} parent=1 // pred_check
      _
    $region19: #{tpu_custom_call.1} parent=1 // pred_check_branch
      %55 = sbr.rel (0) target = $region21
    $region20: #{tpu_custom_call.1} parent=1 // pred_region
      %57 = dma.done [#allocation3], 8192
    $region21: #{tpu_custom_call.1} parent=1 // pred_fallthru
      _
    // Predicated region
    $region22: #{tpu_custom_call.1} parent=1 // pred_check
      _
    $region23: #{tpu_custom_call.1} parent=1 // pred_check_branch
      %59 = sbr.rel (0) target = $region25
    $region24: #{tpu_custom_call.1} parent=1 // pred_region
      %61 = dma.done [#allocation6], 1024
    $region25: #{tpu_custom_call.1} parent=1 // pred_fallthru
      _
    // Predicated region
    $region26: #{tpu_custom_call.1} parent=1 // pred_check
      _
    $region27: #{tpu_custom_call.1} parent=1 // pred_check_branch
      %63 = sbr.rel (0) target = $region29
    $region28: #{tpu_custom_call.1} parent=1 // pred_region
      %65 = dma.done [#allocation6], 16
    $region29: #{tpu_custom_call.1} parent=1 // pred_fallthru
      _
    %v66 = vld [vmem:[#allocation2] sm:$0xff]
    %v67 = vld [vmem:[#allocation2 + $0x8] sm:$0xff]
    %v68 = vld [vmem:[#allocation2 + $0x10] sm:$0xff]
    %v69 = vld [vmem:[#allocation2 + $0x18] sm:$0xff]
    %v70 = vld [vmem:[#allocation2 + $0x20] sm:$0xff]
    %v71 = vld [vmem:[#allocation2 + $0x28] sm:$0xff]
    %v72 = vld [vmem:[#allocation2 + $0x30] sm:$0xff]
    %v73 = vld [vmem:[#allocation2 + $0x38] sm:$0xff]
    %v74 = vld [vmem:[#allocation2 + $0x40] sm:$0xff]
    %v75 = vld [vmem:[#allocation2 + $0x48] sm:$0xff]
    %v76 = vld [vmem:[#allocation2 + $0x50] sm:$0xff]
    %v77 = vld [vmem:[#allocation2 + $0x58] sm:$0xff]
    %v78 = vld [vmem:[#allocation2 + $0x60] sm:$0xff]
    %v79 = vld [vmem:[#allocation2 + $0x68] sm:$0xff]
    %v80 = vld [vmem:[#allocation2 + $0x70] sm:$0xff]
    %v81 = vld [vmem:[#allocation2 + $0x78] sm:$0xff]
    %v82 = vld [vmem:[#allocation2 + $0x80] sm:$0xff]
    %v83 = vld [vmem:[#allocation2 + $0x88] sm:$0xff]
    %v84 = vld [vmem:[#allocation2 + $0x90] sm:$0xff]
    %v85 = vld [vmem:[#allocation2 + $0x98] sm:$0xff]
    %v86 = vld [vmem:[#allocation2 + $0xa0] sm:$0xff]
    %v87 = vld [vmem:[#allocation2 + $0xa8] sm:$0xff]
    %v88 = vld [vmem:[#allocation2 + $0xb0] sm:$0xff]
    %v89 = vld [vmem:[#allocation2 + $0xb8] sm:$0xff]
    %v90 = vld [vmem:[#allocation2 + $0xc0] sm:$0xff]
    %v91 = vld [vmem:[#allocation2 + $0xc8] sm:$0xff]
    %v92 = vld [vmem:[#allocation2 + $0xd0] sm:$0xff]
    %v93 = vld [vmem:[#allocation2 + $0xd8] sm:$0xff]
    %v94 = vld [vmem:[#allocation2 + $0xe0] sm:$0xff]
    %v95 = vld [vmem:[#allocation2 + $0xe8] sm:$0xff]
    %v96 = vld [vmem:[#allocation2 + $0xf0] sm:$0xff]
    %v97 = vld [vmem:[#allocation2 + $0xf8] sm:$0xff]
    %v98 = vld [vmem:[#allocation2 + $0x100] sm:$0xff]
    %v99 = vld [vmem:[#allocation2 + $0x108] sm:$0xff]
    %v100 = vld [vmem:[#allocation2 + $0x110] sm:$0xff]
    %v101 = vld [vmem:[#allocation2 + $0x118] sm:$0xff]
    %v102 = vld [vmem:[#allocation2 + $0x120] sm:$0xff]
    %v103 = vld [vmem:[#allocation2 + $0x128] sm:$0xff]
    %v104 = vld [vmem:[#allocation2 + $0x130] sm:$0xff]
    %v105 = vld [vmem:[#allocation2 + $0x138] sm:$0xff]
    %v106 = vld [vmem:[#allocation2 + $0x140] sm:$0xff]
    %v107 = vld [vmem:[#allocation2 + $0x148] sm:$0xff]
    %v108 = vld [vmem:[#allocation2 + $0x150] sm:$0xff]
    %v109 = vld [vmem:[#allocation2 + $0x158] sm:$0xff]
    %v110 = vld [vmem:[#allocation2 + $0x160] sm:$0xff]
    %v111 = vld [vmem:[#allocation2 + $0x168] sm:$0xff]
    %v112 = vld [vmem:[#allocation2 + $0x170] sm:$0xff]
    %v113 = vld [vmem:[#allocation2 + $0x178] sm:$0xff]
    %v114 = vld [vmem:[#allocation2 + $0x180] sm:$0xff]
    %v115 = vld [vmem:[#allocation2 + $0x188] sm:$0xff]
    %v116 = vld [vmem:[#allocation2 + $0x190] sm:$0xff]
    %v117 = vld [vmem:[#allocation2 + $0x198] sm:$0xff]
    %v118 = vld [vmem:[#allocation2 + $0x1a0] sm:$0xff]
    %v119 = vld [vmem:[#allocation2 + $0x1a8] sm:$0xff]
    %v120 = vld [vmem:[#allocation2 + $0x1b0] sm:$0xff]
    %v121 = vld [vmem:[#allocation2 + $0x1b8] sm:$0xff]
    %v122 = vld [vmem:[#allocation2 + $0x1c0] sm:$0xff]
    %v123 = vld [vmem:[#allocation2 + $0x1c8] sm:$0xff]
    %v124 = vld [vmem:[#allocation2 + $0x1d0] sm:$0xff]
    %v125 = vld [vmem:[#allocation2 + $0x1d8] sm:$0xff]
    %v126 = vld [vmem:[#allocation2 + $0x1e0] sm:$0xff]
    %v127 = vld [vmem:[#allocation2 + $0x1e8] sm:$0xff]
    %v128 = vld [vmem:[#allocation2 + $0x1f0] sm:$0xff]
    %v129 = vld [vmem:[#allocation2 + $0x1f8] sm:$0xff]
    %v130 = vld [vmem:[#allocation5] sm:$0xf]
    %v131 = vld [vmem:[#allocation5 + $0x4] sm:$0xf]
    %v132 = vld [vmem:[#allocation5 + $0x8] sm:$0xf]
    %v133 = vld [vmem:[#allocation5 + $0xc] sm:$0xf]
    %v134 = vld [vmem:[#allocation5 + $0x10] sm:$0xf]
    %v135 = vld [vmem:[#allocation5 + $0x14] sm:$0xf]
    %v136 = vld [vmem:[#allocation5 + $0x18] sm:$0xf]
    %v137 = vld [vmem:[#allocation5 + $0x1c] sm:$0xf]
    %v138 = vld [vmem:[#allocation5 + $0x20] sm:$0xf]
    %v139 = vld [vmem:[#allocation5 + $0x24] sm:$0xf]
    %v140 = vld [vmem:[#allocation5 + $0x28] sm:$0xf]
    %v141 = vld [vmem:[#allocation5 + $0x2c] sm:$0xf]
    %v142 = vld [vmem:[#allocation5 + $0x30] sm:$0xf]
    %v143 = vld [vmem:[#allocation5 + $0x34] sm:$0xf]
    %v144 = vld [vmem:[#allocation5 + $0x38] sm:$0xf]
    %v145 = vld [vmem:[#allocation5 + $0x3c] sm:$0xf]
    %v146 = vld [vmem:[#allocation7] sm:$0x1]
    %v148 = vperm.slane %v146, 0
    %v150 = vlaneseq
    %v151 = vand.u32 %v150, 127
    %v152 = vld [vmem:[%s3] sm:$0x3]
    %vm153 = vcmp.eq.s32.totalorder %v151, 0
    %v154 = vsel %vm153, 1, 0
    %v155 = vcvt.s32.f32 %v154
    %v156 = vpack.c.bf16 %v155, %v155
    %v157 = vpack.c.bf16 %v152, %v152
    %v222 = vunpack.c.l.b16 %v66
    %v223 = vunpack.c.h.b16 %v66
    %v224 = vunpack.c.l.b16 %v67
    %v225 = vunpack.c.h.b16 %v67
    %v226 = vunpack.c.l.b16 %v68
    %v227 = vunpack.c.h.b16 %v68
    %v228 = vunpack.c.l.b16 %v69
    %v229 = vunpack.c.h.b16 %v69
    %v230 = vunpack.c.l.b16 %v70
    %v231 = vunpack.c.h.b16 %v70
    %v232 = vunpack.c.l.b16 %v71
    %v233 = vunpack.c.h.b16 %v71
    %v234 = vunpack.c.l.b16 %v72
    %v235 = vunpack.c.h.b16 %v72
    %v236 = vunpack.c.l.b16 %v73
    %v237 = vunpack.c.h.b16 %v73
    %v238 = vunpack.c.l.b16 %v74
    %v239 = vunpack.c.h.b16 %v74
    %v240 = vunpack.c.l.b16 %v75
    %v241 = vunpack.c.h.b16 %v75
    %v242 = vunpack.c.l.b16 %v76
    %v243 = vunpack.c.h.b16 %v76
    %v244 = vunpack.c.l.b16 %v77
    %v245 = vunpack.c.h.b16 %v77
    %v246 = vunpack.c.l.b16 %v78
    %v247 = vunpack.c.h.b16 %v78
    %v248 = vunpack.c.l.b16 %v79
    %v249 = vunpack.c.h.b16 %v79
    %v250 = vunpack.c.l.b16 %v80
    %v251 = vunpack.c.h.b16 %v80
    %v252 = vunpack.c.l.b16 %v81
    %v253 = vunpack.c.h.b16 %v81
    %v254 = vunpack.c.l.b16 %v82
    %v255 = vunpack.c.h.b16 %v82
    %v256 = vunpack.c.l.b16 %v83
    %v257 = vunpack.c.h.b16 %v83
    %v258 = vunpack.c.l.b16 %v84
    %v259 = vunpack.c.h.b16 %v84
    %v260 = vunpack.c.l.b16 %v85
    %v261 = vunpack.c.h.b16 %v85
    %v262 = vunpack.c.l.b16 %v86
    %v263 = vunpack.c.h.b16 %v86
    %v264 = vunpack.c.l.b16 %v87
    %v265 = vunpack.c.h.b16 %v87
    %v266 = vunpack.c.l.b16 %v88
    %v267 = vunpack.c.h.b16 %v88
    %v268 = vunpack.c.l.b16 %v89
    %v269 = vunpack.c.h.b16 %v89
    %v270 = vunpack.c.l.b16 %v90
    %v271 = vunpack.c.h.b16 %v90
    %v272 = vunpack.c.l.b16 %v91
    %v273 = vunpack.c.h.b16 %v91
    %v274 = vunpack.c.l.b16 %v92
    %v275 = vunpack.c.h.b16 %v92
    %v276 = vunpack.c.l.b16 %v93
    %v277 = vunpack.c.h.b16 %v93
    %v278 = vunpack.c.l.b16 %v94
    %v279 = vunpack.c.h.b16 %v94
    %v280 = vunpack.c.l.b16 %v95
    %v281 = vunpack.c.h.b16 %v95
    %v282 = vunpack.c.l.b16 %v96
    %v283 = vunpack.c.h.b16 %v96
    %v284 = vunpack.c.l.b16 %v97
    %v285 = vunpack.c.h.b16 %v97
    %v286 = vunpack.c.l.b16 %v98
    %v287 = vunpack.c.h.b16 %v98
    %v288 = vunpack.c.l.b16 %v99
    %v289 = vunpack.c.h.b16 %v99
    %v290 = vunpack.c.l.b16 %v100
    %v291 = vunpack.c.h.b16 %v100
    %v292 = vunpack.c.l.b16 %v101
    %v293 = vunpack.c.h.b16 %v101
    %v294 = vunpack.c.l.b16 %v102
    %v295 = vunpack.c.h.b16 %v102
    %v296 = vunpack.c.l.b16 %v103
    %v297 = vunpack.c.h.b16 %v103
    %v298 = vunpack.c.l.b16 %v104
    %v299 = vunpack.c.h.b16 %v104
    %v300 = vunpack.c.l.b16 %v105
    %v301 = vunpack.c.h.b16 %v105
    %v302 = vunpack.c.l.b16 %v106
    %v303 = vunpack.c.h.b16 %v106
    %v304 = vunpack.c.l.b16 %v107
    %v305 = vunpack.c.h.b16 %v107
    %v306 = vunpack.c.l.b16 %v108
    %v307 = vunpack.c.h.b16 %v108
    %v308 = vunpack.c.l.b16 %v109
    %v309 = vunpack.c.h.b16 %v109
    %v310 = vunpack.c.l.b16 %v110
    %v311 = vunpack.c.h.b16 %v110
    %v312 = vunpack.c.l.b16 %v111
    %v313 = vunpack.c.h.b16 %v111
    %v314 = vunpack.c.l.b16 %v112
    %v315 = vunpack.c.h.b16 %v112
    %v316 = vunpack.c.l.b16 %v113
    %v317 = vunpack.c.h.b16 %v113
    %v318 = vunpack.c.l.b16 %v114
    %v319 = vunpack.c.h.b16 %v114
    %v320 = vunpack.c.l.b16 %v115
    %v321 = vunpack.c.h.b16 %v115
    %v322 = vunpack.c.l.b16 %v116
    %v323 = vunpack.c.h.b16 %v116
    %v324 = vunpack.c.l.b16 %v117
    %v325 = vunpack.c.h.b16 %v117
    %v326 = vunpack.c.l.b16 %v118
    %v327 = vunpack.c.h.b16 %v118
    %v328 = vunpack.c.l.b16 %v119
    %v329 = vunpack.c.h.b16 %v119
    %v330 = vunpack.c.l.b16 %v120
    %v331 = vunpack.c.h.b16 %v120
    %v332 = vunpack.c.l.b16 %v121
    %v333 = vunpack.c.h.b16 %v121
    %v334 = vunpack.c.l.b16 %v122
    %v335 = vunpack.c.h.b16 %v122
    %v336 = vunpack.c.l.b16 %v123
    %v337 = vunpack.c.h.b16 %v123
    %v338 = vunpack.c.l.b16 %v124
    %v339 = vunpack.c.h.b16 %v124
    %v340 = vunpack.c.l.b16 %v125
    %v341 = vunpack.c.h.b16 %v125
    %v342 = vunpack.c.l.b16 %v126
    %v343 = vunpack.c.h.b16 %v126
    %v344 = vunpack.c.l.b16 %v127
    %v345 = vunpack.c.h.b16 %v127
    %v346 = vunpack.c.l.b16 %v128
    %v347 = vunpack.c.h.b16 %v128
    %v348 = vunpack.c.l.b16 %v129
    %v349 = vunpack.c.h.b16 %v129
    %v350 = vpack.c.b16 %v226, %v222
    %v351 = vpack.c.b16 %v227, %v223
    %v352 = vpack.c.b16 %v228, %v224
    %v353 = vpack.c.b16 %v229, %v225
    %v354 = vpack.c.b16 %v234, %v230
    %v355 = vpack.c.b16 %v235, %v231
    %v356 = vpack.c.b16 %v236, %v232
    %v357 = vpack.c.b16 %v237, %v233
    %v358 = vpack.c.b16 %v242, %v238
    %v359 = vpack.c.b16 %v243, %v239
    %v360 = vpack.c.b16 %v244, %v240
    %v361 = vpack.c.b16 %v245, %v241
    %v362 = vpack.c.b16 %v250, %v246
    %v363 = vpack.c.b16 %v251, %v247
    %v364 = vpack.c.b16 %v252, %v248
    %v365 = vpack.c.b16 %v253, %v249
    %v366 = vpack.c.b16 %v258, %v254
    %v367 = vpack.c.b16 %v259, %v255
    %v368 = vpack.c.b16 %v260, %v256
    %v369 = vpack.c.b16 %v261, %v257
    %v370 = vpack.c.b16 %v266, %v262
    %v371 = vpack.c.b16 %v267, %v263
    %v372 = vpack.c.b16 %v268, %v264
    %v373 = vpack.c.b16 %v269, %v265
    %v374 = vpack.c.b16 %v274, %v270
    %v375 = vpack.c.b16 %v275, %v271
    %v376 = vpack.c.b16 %v276, %v272
    %v377 = vpack.c.b16 %v277, %v273
    %v378 = vpack.c.b16 %v282, %v278
    %v379 = vpack.c.b16 %v283, %v279
    %v380 = vpack.c.b16 %v284, %v280
    %v381 = vpack.c.b16 %v285, %v281
    %v382 = vpack.c.b16 %v290, %v286
    %v383 = vpack.c.b16 %v291, %v287
    %v384 = vpack.c.b16 %v292, %v288
    %v385 = vpack.c.b16 %v293, %v289
    %v386 = vpack.c.b16 %v298, %v294
    %v387 = vpack.c.b16 %v299, %v295
    %v388 = vpack.c.b16 %v300, %v296
    %v389 = vpack.c.b16 %v301, %v297
    %v390 = vpack.c.b16 %v306, %v302
    %v391 = vpack.c.b16 %v307, %v303
    %v392 = vpack.c.b16 %v308, %v304
    %v393 = vpack.c.b16 %v309, %v305
    %v394 = vpack.c.b16 %v314, %v310
    %v395 = vpack.c.b16 %v315, %v311
    %v396 = vpack.c.b16 %v316, %v312
    %v397 = vpack.c.b16 %v317, %v313
    %v398 = vpack.c.b16 %v322, %v318
    %v399 = vpack.c.b16 %v323, %v319
    %v400 = vpack.c.b16 %v324, %v320
    %v401 = vpack.c.b16 %v325, %v321
    %v402 = vpack.c.b16 %v330, %v326
    %v403 = vpack.c.b16 %v331, %v327
    %v404 = vpack.c.b16 %v332, %v328
    %v405 = vpack.c.b16 %v333, %v329
    %v406 = vpack.c.b16 %v338, %v334
    %v407 = vpack.c.b16 %v339, %v335
    %v408 = vpack.c.b16 %v340, %v336
    %v409 = vpack.c.b16 %v341, %v337
    %v410 = vpack.c.b16 %v346, %v342
    %v411 = vpack.c.b16 %v347, %v343
    %v412 = vpack.c.b16 %v348, %v344
    %v413 = vpack.c.b16 %v349, %v345
    %478 = vmatpush.bf16.msra.mxu0 %v378
    %479 = vmatpush.bf16.msra.mxu0 %v374
    %480 = vmatpush.bf16.msra.mxu0 %v370
    %481 = vmatpush.bf16.msra.mxu0 %v366
    %482 = vmatpush.bf16.msra.mxu0 %v362
    %483 = vmatpush.bf16.msra.mxu0 %v358
    %484 = vmatpush.bf16.msra.mxu0 %v354
    %485 = vmatpush.bf16.msra.mxu0 %v350
    %486 = vmatmul.bf16.gmra.mxu0 %v156
    %v487 = vpop.f32.mrf.mxu0
    %v488 = vadd.f32 0.0, %v487
    %v489 = vpop.f32.mrf.mxu0
    %490 = vdwg.mxu0
    %491 = vmatpush.bf16.msra.mxu0 %v410
    %492 = vmatpush.bf16.msra.mxu0 %v406
    %493 = vmatpush.bf16.msra.mxu0 %v402
    %494 = vmatpush.bf16.msra.mxu0 %v398
    %495 = vmatpush.bf16.msra.mxu0 %v394
    %496 = vmatpush.bf16.msra.mxu0 %v390
    %497 = vmatpush.bf16.msra.mxu0 %v386
    %498 = vmatpush.bf16.msra.mxu0 %v382
    %499 = vmatmul.bf16.gmra.mxu0 %v157
    %v500 = vpop.f32.mrf.mxu0
    %v501 = vadd.f32 %v488, %v500
    %v502 = vpop.f32.mrf.mxu0
    %503 = vdwg.mxu0
    %504 = vmatpush.bf16.msra.mxu0 %v379
    %505 = vmatpush.bf16.msra.mxu0 %v375
    %506 = vmatpush.bf16.msra.mxu0 %v371
    %507 = vmatpush.bf16.msra.mxu0 %v367
    %508 = vmatpush.bf16.msra.mxu0 %v363
    %509 = vmatpush.bf16.msra.mxu0 %v359
    %510 = vmatpush.bf16.msra.mxu0 %v355
    %511 = vmatpush.bf16.msra.mxu0 %v351
    %512 = vmatmul.bf16.gmra.mxu0 %v156
    %v513 = vpop.f32.mrf.mxu0
    %v514 = vadd.f32 0.0, %v513
    %v515 = vpop.f32.mrf.mxu0
    %516 = vdwg.mxu0
    %517 = vmatpush.bf16.msra.mxu0 %v411
    %518 = vmatpush.bf16.msra.mxu0 %v407
    %519 = vmatpush.bf16.msra.mxu0 %v403
    %520 = vmatpush.bf16.msra.mxu0 %v399
    %521 = vmatpush.bf16.msra.mxu0 %v395
    %522 = vmatpush.bf16.msra.mxu0 %v391
    %523 = vmatpush.bf16.msra.mxu0 %v387
    %524 = vmatpush.bf16.msra.mxu0 %v383
    %525 = vmatmul.bf16.gmra.mxu0 %v157
    %v526 = vpop.f32.mrf.mxu0
    %v527 = vadd.f32 %v514, %v526
    %v528 = vpop.f32.mrf.mxu0
    %529 = vdwg.mxu0
    %530 = vmatpush.bf16.msra.mxu0 %v380
    %531 = vmatpush.bf16.msra.mxu0 %v376
    %532 = vmatpush.bf16.msra.mxu0 %v372
    %533 = vmatpush.bf16.msra.mxu0 %v368
    %534 = vmatpush.bf16.msra.mxu0 %v364
    %535 = vmatpush.bf16.msra.mxu0 %v360
    %536 = vmatpush.bf16.msra.mxu0 %v356
    %537 = vmatpush.bf16.msra.mxu0 %v352
    %538 = vmatmul.bf16.gmra.mxu0 %v156
    %v539 = vpop.f32.mrf.mxu0
    %v540 = vadd.f32 0.0, %v539
    %v541 = vpop.f32.mrf.mxu0
    %542 = vdwg.mxu0
    %543 = vmatpush.bf16.msra.mxu0 %v412
    %544 = vmatpush.bf16.msra.mxu0 %v408
    %545 = vmatpush.bf16.msra.mxu0 %v404
    %546 = vmatpush.bf16.msra.mxu0 %v400
    %547 = vmatpush.bf16.msra.mxu0 %v396
    %548 = vmatpush.bf16.msra.mxu0 %v392
    %549 = vmatpush.bf16.msra.mxu0 %v388
    %550 = vmatpush.bf16.msra.mxu0 %v384
    %551 = vmatmul.bf16.gmra.mxu0 %v157
    %v552 = vpop.f32.mrf.mxu0
    %v553 = vadd.f32 %v540, %v552
    %v554 = vpop.f32.mrf.mxu0
    %555 = vdwg.mxu0
    %556 = vmatpush.bf16.msra.mxu0 %v381
    %557 = vmatpush.bf16.msra.mxu0 %v377
    %558 = vmatpush.bf16.msra.mxu0 %v373
    %559 = vmatpush.bf16.msra.mxu0 %v369
    %560 = vmatpush.bf16.msra.mxu0 %v365
    %561 = vmatpush.bf16.msra.mxu0 %v361
    %562 = vmatpush.bf16.msra.mxu0 %v357
    %563 = vmatpush.bf16.msra.mxu0 %v353
    %564 = vmatmul.bf16.gmra.mxu0 %v156
    %v565 = vpop.f32.mrf.mxu0
    %v566 = vadd.f32 0.0, %v565
    %v567 = vpop.f32.mrf.mxu0
    %568 = vdwg.mxu0
    %569 = vmatpush.bf16.msra.mxu0 %v413
    %570 = vmatpush.bf16.msra.mxu0 %v409
    %571 = vmatpush.bf16.msra.mxu0 %v405
    %572 = vmatpush.bf16.msra.mxu0 %v401
    %573 = vmatpush.bf16.msra.mxu0 %v397
    %574 = vmatpush.bf16.msra.mxu0 %v393
    %575 = vmatpush.bf16.msra.mxu0 %v389
    %576 = vmatpush.bf16.msra.mxu0 %v385
    %577 = vmatmul.bf16.gmra.mxu0 %v157
    %v578 = vpop.f32.mrf.mxu0
    %v579 = vadd.f32 %v566, %v578
    %v580 = vpop.f32.mrf.mxu0
    %581 = vdwg.mxu0
    %v582 = vxor.u32 %v501, 2147483648
    %v583 = vmul.f32 %v582, 1.442695
    %v584 = vpow.pop %v583
    %v585 = vadd.f32 %v584, 1.0
    %v586 = vrcp.pop %v585
    %v587 = vmul.f32 %v585, %v586
    %v588 = vsub.f32 1.0, %v587
    %v589 = vmul.f32 %v586, %v588
    %v590 = vadd.f32 %v586, %v589
    %vm591 = vweird.f32 %v585
    %vm592 = vweird.f32 %v586
    %vm593 = vmor %vm591, %vm592
    %v594 = vsel %vm593, %v586, %v590
    %v595 = vand.u32 2147483647, %v585
    %vm596 = vcmp.eq.f32.partialorder %v595, 8.507059e+37
    %v597 = vand.u32 %v585, 2147483648
    %v598 = vor.u32 1.1754944e-38, %v597
    %v599 = vsel %vm596, %v598, %v594
    %v600 = vmul.f32 1.0, %v599
    %v601 = vxor.u32 %v527, 2147483648
    %v602 = vmul.f32 %v601, 1.442695
    %v603 = vpow.pop %v602
    %v604 = vadd.f32 %v603, 1.0
    %v605 = vrcp.pop %v604
    %v606 = vmul.f32 %v604, %v605
    %v607 = vsub.f32 1.0, %v606
    %v608 = vmul.f32 %v605, %v607
    %v609 = vadd.f32 %v605, %v608
    %vm610 = vweird.f32 %v604
    %vm611 = vweird.f32 %v605
    %vm612 = vmor %vm610, %vm611
    %v613 = vsel %vm612, %v605, %v609
    %v614 = vand.u32 2147483647, %v604
    %vm615 = vcmp.eq.f32.partialorder %v614, 8.507059e+37
    %v616 = vand.u32 %v604, 2147483648
    %v617 = vor.u32 1.1754944e-38, %v616
    %v618 = vsel %vm615, %v617, %v613
    %v619 = vmul.f32 1.0, %v618
    %v620 = vmul.f32 %v600, %v579
    %v621 = vadd.f32 %v553, %v620
    %v622 = vtanh.pop %v621
    %v623 = vsub.f32 1.0, %v619
    %v624 = vmul.f32 %v623, %v622
    %v625 = vmul.f32 %v619, %v152
    %v626 = vadd.f32 %v624, %v625
    %v627 = vpack.c.bf16 %v626, %v626
    %v644 = vunpack.c.l.b16 %v130
    %v645 = vunpack.c.l.b16 %v131
    %v646 = vunpack.c.l.b16 %v132
    %v647 = vunpack.c.l.b16 %v133
    %v648 = vunpack.c.l.b16 %v134
    %v649 = vunpack.c.l.b16 %v135
    %v650 = vunpack.c.l.b16 %v136
    %v651 = vunpack.c.l.b16 %v137
    %v652 = vunpack.c.l.b16 %v138
    %v653 = vunpack.c.l.b16 %v139
    %v654 = vunpack.c.l.b16 %v140
    %v655 = vunpack.c.l.b16 %v141
    %v656 = vunpack.c.l.b16 %v142
    %v657 = vunpack.c.l.b16 %v143
    %v658 = vunpack.c.l.b16 %v144
    %v659 = vunpack.c.l.b16 %v145
    %v660 = vpack.c.b16 %v645, %v644
    %v661 = vpack.c.b16 %v647, %v646
    %v662 = vpack.c.b16 %v649, %v648
    %v663 = vpack.c.b16 %v651, %v650
    %v664 = vpack.c.b16 %v653, %v652
    %v665 = vpack.c.b16 %v655, %v654
    %v666 = vpack.c.b16 %v657, %v656
    %v667 = vpack.c.b16 %v659, %v658
    %676 = vmatpush.bf16.msra.mxu0 %v667
    %677 = vmatpush.bf16.msra.mxu0 %v666
    %678 = vmatpush.bf16.msra.mxu0 %v665
    %679 = vmatpush.bf16.msra.mxu0 %v664
    %680 = vmatpush.bf16.msra.mxu0 %v663
    %681 = vmatpush.bf16.msra.mxu0 %v662
    %682 = vmatpush.bf16.msra.mxu0 %v661
    %683 = vmatpush.bf16.msra.mxu0 %v660
    %684 = vmatmul.bf16.gmra.mxu0 %v627
    %v685 = vpop.f32.mrf.mxu0
    %v686 = vadd.f32 %v148, %v685
    %v687 = vpop.f32.mrf.mxu0
    %688 = vdwg.mxu0
    %vm689 = vcmask 1041408
    %v690 = vsel %vm689, %v686, -inf
    %691 = vmax.xlane.f32.xlu0 %v690
    %v692 = vpop.xlane.xlu0 %691
    %v693 = vsub.f32 %v686, %v692
    %v694 = vmul.f32 %v693, 1.442695
    %v695 = vpow.pop %v694
    %v696 = vsel %vm689, %v695, 0.0
    %697 = vadd.xlane.f32.xlu0 %v696
    %v698 = vpop.xlane.xlu0 %697
    %v699 = vlog2.pop %v698
    %v700 = vmul.f32 %v699, 0.6931472
    %v701 = vadd.f32 %v700, %v692
    %v702 = vsub.f32 %v686, %v701
    %703 = vst [vmem:[#allocation8] sm:$0x3] %v702
    %vm704 = vcmp.ge.f32.partialorder %v686, %v692
    %v705 = vsel %vm704, %v151, 128
    %v706 = vsel %vm689, %v705, 2147483647
    %v707 = vand.u32 %v706, 65535
    %v708 = vshra.s32 %v706, 16
    %v709 = vcvt.s32.f32 %v707
    %v710 = vcvt.s32.f32 %v708
    %711 = vmin.xlane.f32.xlu0 %v710
    %v712 = vpop.xlane.xlu0 %711
    %vm713 = vcmp.eq.f32.partialorder %v710, %v712
    %v714 = vsel %vm713, %v709, inf
    %715 = vmin.xlane.f32.xlu0 %v714
    %v716 = vpop.xlane.xlu0 %715
    %v717 = vcvt.f32.s32 %v716
    %v718 = vcvt.f32.s32 %v712
    %v719 = vshll.u32 %v718, 16
    %v720 = vadd.s32 %v719, %v717
    %vm721 = vcmp.eq.s32.totalorder %v151, %v720
    %v722 = vsel %vm721, 1, 0
    %v723 = vcvt.s32.f32 %v722
    %v724 = vpack.c.bf16 %v723, %v723
    %725 = vmatpush.bf16.msra.mxu0 %v378
    %726 = vmatpush.bf16.msra.mxu0 %v374
    %727 = vmatpush.bf16.msra.mxu0 %v370
    %728 = vmatpush.bf16.msra.mxu0 %v366
    %729 = vmatpush.bf16.msra.mxu0 %v362
    %730 = vmatpush.bf16.msra.mxu0 %v358
    %731 = vmatpush.bf16.msra.mxu0 %v354
    %732 = vmatpush.bf16.msra.mxu0 %v350
    %733 = vmatmul.bf16.gmra.mxu0 %v724
    %v734 = vpop.f32.mrf.mxu0
    %v735 = vadd.f32 0.0, %v734
    %v736 = vpop.f32.mrf.mxu0
    %737 = vdwg.mxu0
    %738 = vmatpush.bf16.msra.mxu0 %v410
    %739 = vmatpush.bf16.msra.mxu0 %v406
    %740 = vmatpush.bf16.msra.mxu0 %v402
    %741 = vmatpush.bf16.msra.mxu0 %v398
    %742 = vmatpush.bf16.msra.mxu0 %v394
    %743 = vmatpush.bf16.msra.mxu0 %v390
    %744 = vmatpush.bf16.msra.mxu0 %v386
    %745 = vmatpush.bf16.msra.mxu0 %v382
    %746 = vmatmul.bf16.gmra.mxu0 %v627
    %v747 = vpop.f32.mrf.mxu0
    %v748 = vadd.f32 %v735, %v747
    %v749 = vpop.f32.mrf.mxu0
    %750 = vdwg.mxu0
    %751 = vmatpush.bf16.msra.mxu0 %v379
    %752 = vmatpush.bf16.msra.mxu0 %v375
    %753 = vmatpush.bf16.msra.mxu0 %v371
    %754 = vmatpush.bf16.msra.mxu0 %v367
    %755 = vmatpush.bf16.msra.mxu0 %v363
    %756 = vmatpush.bf16.msra.mxu0 %v359
    %757 = vmatpush.bf16.msra.mxu0 %v355
    %758 = vmatpush.bf16.msra.mxu0 %v351
    %759 = vmatmul.bf16.gmra.mxu0 %v724
    %v760 = vpop.f32.mrf.mxu0
    %v761 = vadd.f32 0.0, %v760
    %v762 = vpop.f32.mrf.mxu0
    %763 = vdwg.mxu0
    %764 = vmatpush.bf16.msra.mxu0 %v411
    %765 = vmatpush.bf16.msra.mxu0 %v407
    %766 = vmatpush.bf16.msra.mxu0 %v403
    %767 = vmatpush.bf16.msra.mxu0 %v399
    %768 = vmatpush.bf16.msra.mxu0 %v395
    %769 = vmatpush.bf16.msra.mxu0 %v391
    %770 = vmatpush.bf16.msra.mxu0 %v387
    %771 = vmatpush.bf16.msra.mxu0 %v383
    %772 = vmatmul.bf16.gmra.mxu0 %v627
    %v773 = vpop.f32.mrf.mxu0
    %v774 = vadd.f32 %v761, %v773
    %v775 = vpop.f32.mrf.mxu0
    %776 = vdwg.mxu0
    %777 = vmatpush.bf16.msra.mxu0 %v380
    %778 = vmatpush.bf16.msra.mxu0 %v376
    %779 = vmatpush.bf16.msra.mxu0 %v372
    %780 = vmatpush.bf16.msra.mxu0 %v368
    %781 = vmatpush.bf16.msra.mxu0 %v364
    %782 = vmatpush.bf16.msra.mxu0 %v360
    %783 = vmatpush.bf16.msra.mxu0 %v356
    %784 = vmatpush.bf16.msra.mxu0 %v352
    %785 = vmatmul.bf16.gmra.mxu0 %v724
    %v786 = vpop.f32.mrf.mxu0
    %v787 = vadd.f32 0.0, %v786
    %v788 = vpop.f32.mrf.mxu0
    %789 = vdwg.mxu0
    %790 = vmatpush.bf16.msra.mxu0 %v412
    %791 = vmatpush.bf16.msra.mxu0 %v408
    %792 = vmatpush.bf16.msra.mxu0 %v404
    %793 = vmatpush.bf16.msra.mxu0 %v400
    %794 = vmatpush.bf16.msra.mxu0 %v396
    %795 = vmatpush.bf16.msra.mxu0 %v392
    %796 = vmatpush.bf16.msra.mxu0 %v388
    %797 = vmatpush.bf16.msra.mxu0 %v384
    %798 = vmatmul.bf16.gmra.mxu0 %v627
    %v799 = vpop.f32.mrf.mxu0
    %v800 = vadd.f32 %v787, %v799
    %v801 = vpop.f32.mrf.mxu0
    %802 = vdwg.mxu0
    %803 = vmatpush.bf16.msra.mxu0 %v381
    %804 = vmatpush.bf16.msra.mxu0 %v377
    %805 = vmatpush.bf16.msra.mxu0 %v373
    %806 = vmatpush.bf16.msra.mxu0 %v369
    %807 = vmatpush.bf16.msra.mxu0 %v365
    %808 = vmatpush.bf16.msra.mxu0 %v361
    %809 = vmatpush.bf16.msra.mxu0 %v357
    %810 = vmatpush.bf16.msra.mxu0 %v353
    %811 = vmatmul.bf16.gmra.mxu0 %v724
    %v812 = vpop.f32.mrf.mxu0
    %v813 = vadd.f32 0.0, %v812
    %v814 = vpop.f32.mrf.mxu0
    %815 = vdwg.mxu0
    %816 = vmatpush.bf16.msra.mxu0 %v413
    %817 = vmatpush.bf16.msra.mxu0 %v409
    %818 = vmatpush.bf16.msra.mxu0 %v405
    %819 = vmatpush.bf16.msra.mxu0 %v401
    %820 = vmatpush.bf16.msra.mxu0 %v397
    %821 = vmatpush.bf16.msra.mxu0 %v393
    %822 = vmatpush.bf16.msra.mxu0 %v389
    %823 = vmatpush.bf16.msra.mxu0 %v385
    %824 = vmatmul.bf16.gmra.mxu0 %v627
    %v825 = vpop.f32.mrf.mxu0
    %v826 = vadd.f32 %v813, %v825
    %v827 = vpop.f32.mrf.mxu0
    %828 = vdwg.mxu0
    %v829 = vxor.u32 %v748, 2147483648
    %v830 = vmul.f32 %v829, 1.442695
    %v831 = vpow.pop %v830
    %v832 = vadd.f32 %v831, 1.0
    %v833 = vrcp.pop %v832
    %v834 = vmul.f32 %v832, %v833
    %v835 = vsub.f32 1.0, %v834
    %v836 = vmul.f32 %v833, %v835
    %v837 = vadd.f32 %v833, %v836
    %vm838 = vweird.f32 %v832
    %vm839 = vweird.f32 %v833
    %vm840 = vmor %vm838, %vm839
    %v841 = vsel %vm840, %v833, %v837
    %v842 = vand.u32 2147483647, %v832
    %vm843 = vcmp.eq.f32.partialorder %v842, 8.507059e+37
    %v844 = vand.u32 %v832, 2147483648
    %v845 = vor.u32 1.1754944e-38, %v844
    %v846 = vsel %vm843, %v845, %v841
    %v847 = vmul.f32 1.0, %v846
    %v848 = vxor.u32 %v774, 2147483648
    %v849 = vmul.f32 %v848, 1.442695
    %v850 = vpow.pop %v849
    %v851 = vadd.f32 %v850, 1.0
    %v852 = vrcp.pop %v851
    %v853 = vmul.f32 %v851, %v852
    %v854 = vsub.f32 1.0, %v853
    %v855 = vmul.f32 %v852, %v854
    %v856 = vadd.f32 %v852, %v855
    %vm857 = vweird.f32 %v851
    %vm858 = vweird.f32 %v852
    %vm859 = vmor %vm857, %vm858
    %v860 = vsel %vm859, %v852, %v856
    %v861 = vand.u32 2147483647, %v851
    %vm862 = vcmp.eq.f32.partialorder %v861, 8.507059e+37
    %v863 = vand.u32 %v851, 2147483648
    %v864 = vor.u32 1.1754944e-38, %v863
    %v865 = vsel %vm862, %v864, %v860
    %v866 = vmul.f32 1.0, %v865
    %v867 = vmul.f32 %v847, %v826
    %v868 = vadd.f32 %v800, %v867
    %v869 = vtanh.pop %v868
    %v870 = vsub.f32 1.0, %v866
    %v871 = vmul.f32 %v870, %v869
    %v872 = vmul.f32 %v866, %v626
    %v873 = vadd.f32 %v871, %v872
    %v874 = vpack.c.bf16 %v873, %v873
    %875 = vmatpush.bf16.msra.mxu0 %v667
    %876 = vmatpush.bf16.msra.mxu0 %v666
    %877 = vmatpush.bf16.msra.mxu0 %v665
    %878 = vmatpush.bf16.msra.mxu0 %v664
    %879 = vmatpush.bf16.msra.mxu0 %v663
    %880 = vmatpush.bf16.msra.mxu0 %v662
    %881 = vmatpush.bf16.msra.mxu0 %v661
    %882 = vmatpush.bf16.msra.mxu0 %v660
    %883 = vmatmul.bf16.gmra.mxu0 %v874
    %v884 = vpop.f32.mrf.mxu0
    %v885 = vadd.f32 %v148, %v884
    %v886 = vpop.f32.mrf.mxu0
    %887 = vdwg.mxu0
    %v888 = vsel %vm689, %v885, -inf
    %889 = vmax.xlane.f32.xlu0 %v888
    %v890 = vpop.xlane.xlu0 %889
    %v891 = vsub.f32 %v885, %v890
    %v892 = vmul.f32 %v891, 1.442695
    %v893 = vpow.pop %v892
    %v894 = vsel %vm689, %v893, 0.0
    %895 = vadd.xlane.f32.xlu0 %v894
    %v896 = vpop.xlane.xlu0 %895
    %v897 = vlog2.pop %v896
    %v898 = vmul.f32 %v897, 0.6931472
    %v899 = vadd.f32 %v898, %v890
    %v900 = vsub.f32 %v885, %v899
    %s901 = scalar_lea.vmem [#allocation8], 2
    %902 = vst [vmem:[%s901] sm:$0x3] %v900
    %vm903 = vcmp.ge.f32.partialorder %v885, %v890
    %v904 = vsel %vm903, %v151, 128
    %v905 = vsel %vm689, %v904, 2147483647
    %v906 = vand.u32 %v905, 65535
    %v907 = vshra.s32 %v905, 16
    %v908 = vcvt.s32.f32 %v906
    %v909 = vcvt.s32.f32 %v907
    %910 = vmin.xlane.f32.xlu0 %v909
    %v911 = vpop.xlane.xlu0 %910
    %vm912 = vcmp.eq.f32.partialorder %v909, %v911
    %v913 = vsel %vm912, %v908, inf
    %914 = vmin.xlane.f32.xlu0 %v913
    %v915 = vpop.xlane.xlu0 %914
    %v916 = vcvt.f32.s32 %v915
    %v917 = vcvt.f32.s32 %v911
    %v918 = vshll.u32 %v917, 16
    %v919 = vadd.s32 %v918, %v916
    %vm920 = vcmp.eq.s32.totalorder %v151, %v919
    %v921 = vsel %vm920, 1, 0
    %v922 = vcvt.s32.f32 %v921
    %v923 = vpack.c.bf16 %v922, %v922
    %924 = vmatpush.bf16.msra.mxu0 %v378
    %925 = vmatpush.bf16.msra.mxu0 %v374
    %926 = vmatpush.bf16.msra.mxu0 %v370
    %927 = vmatpush.bf16.msra.mxu0 %v366
    %928 = vmatpush.bf16.msra.mxu0 %v362
    %929 = vmatpush.bf16.msra.mxu0 %v358
    %930 = vmatpush.bf16.msra.mxu0 %v354
    %931 = vmatpush.bf16.msra.mxu0 %v350
    %932 = vmatmul.bf16.gmra.mxu0 %v923
    %v933 = vpop.f32.mrf.mxu0
    %v934 = vadd.f32 0.0, %v933
    %v935 = vpop.f32.mrf.mxu0
    %936 = vdwg.mxu0
    %937 = vmatpush.bf16.msra.mxu0 %v410
    %938 = vmatpush.bf16.msra.mxu0 %v406
    %939 = vmatpush.bf16.msra.mxu0 %v402
    %940 = vmatpush.bf16.msra.mxu0 %v398
    %941 = vmatpush.bf16.msra.mxu0 %v394
    %942 = vmatpush.bf16.msra.mxu0 %v390
    %943 = vmatpush.bf16.msra.mxu0 %v386
    %944 = vmatpush.bf16.msra.mxu0 %v382
    %945 = vmatmul.bf16.gmra.mxu0 %v874
    %v946 = vpop.f32.mrf.mxu0
    %v947 = vadd.f32 %v934, %v946
    %v948 = vpop.f32.mrf.mxu0
    %949 = vdwg.mxu0
    %950 = vmatpush.bf16.msra.mxu0 %v379
    %951 = vmatpush.bf16.msra.mxu0 %v375
    %952 = vmatpush.bf16.msra.mxu0 %v371
    %953 = vmatpush.bf16.msra.mxu0 %v367
    %954 = vmatpush.bf16.msra.mxu0 %v363
    %955 = vmatpush.bf16.msra.mxu0 %v359
    %956 = vmatpush.bf16.msra.mxu0 %v355
    %957 = vmatpush.bf16.msra.mxu0 %v351
    %958 = vmatmul.bf16.gmra.mxu0 %v923
    %v959 = vpop.f32.mrf.mxu0
    %v960 = vadd.f32 0.0, %v959
    %v961 = vpop.f32.mrf.mxu0
    %962 = vdwg.mxu0
    %963 = vmatpush.bf16.msra.mxu0 %v411
    %964 = vmatpush.bf16.msra.mxu0 %v407
    %965 = vmatpush.bf16.msra.mxu0 %v403
    %966 = vmatpush.bf16.msra.mxu0 %v399
    %967 = vmatpush.bf16.msra.mxu0 %v395
    %968 = vmatpush.bf16.msra.mxu0 %v391
    %969 = vmatpush.bf16.msra.mxu0 %v387
    %970 = vmatpush.bf16.msra.mxu0 %v383
    %971 = vmatmul.bf16.gmra.mxu0 %v874
    %v972 = vpop.f32.mrf.mxu0
    %v973 = vadd.f32 %v960, %v972
    %v974 = vpop.f32.mrf.mxu0
    %975 = vdwg.mxu0
    %976 = vmatpush.bf16.msra.mxu0 %v380
    %977 = vmatpush.bf16.msra.mxu0 %v376
    %978 = vmatpush.bf16.msra.mxu0 %v372
    %979 = vmatpush.bf16.msra.mxu0 %v368
    %980 = vmatpush.bf16.msra.mxu0 %v364
    %981 = vmatpush.bf16.msra.mxu0 %v360
    %982 = vmatpush.bf16.msra.mxu0 %v356
    %983 = vmatpush.bf16.msra.mxu0 %v352
    %984 = vmatmul.bf16.gmra.mxu0 %v923
    %v985 = vpop.f32.mrf.mxu0
    %v986 = vadd.f32 0.0, %v985
    %v987 = vpop.f32.mrf.mxu0
    %988 = vdwg.mxu0
    %989 = vmatpush.bf16.msra.mxu0 %v412
    %990 = vmatpush.bf16.msra.mxu0 %v408
    %991 = vmatpush.bf16.msra.mxu0 %v404
    %992 = vmatpush.bf16.msra.mxu0 %v400
    %993 = vmatpush.bf16.msra.mxu0 %v396
    %994 = vmatpush.bf16.msra.mxu0 %v392
    %995 = vmatpush.bf16.msra.mxu0 %v388
    %996 = vmatpush.bf16.msra.mxu0 %v384
    %997 = vmatmul.bf16.gmra.mxu0 %v874
    %v998 = vpop.f32.mrf.mxu0
    %v999 = vadd.f32 %v986, %v998
    %v1000 = vpop.f32.mrf.mxu0
    %1001 = vdwg.mxu0
    %1002 = vmatpush.bf16.msra.mxu0 %v381
    %1003 = vmatpush.bf16.msra.mxu0 %v377
    %1004 = vmatpush.bf16.msra.mxu0 %v373
    %1005 = vmatpush.bf16.msra.mxu0 %v369
    %1006 = vmatpush.bf16.msra.mxu0 %v365
    %1007 = vmatpush.bf16.msra.mxu0 %v361
    %1008 = vmatpush.bf16.msra.mxu0 %v357
    %1009 = vmatpush.bf16.msra.mxu0 %v353
    %1010 = vmatmul.bf16.gmra.mxu0 %v923
    %v1011 = vpop.f32.mrf.mxu0
    %v1012 = vadd.f32 0.0, %v1011
    %v1013 = vpop.f32.mrf.mxu0
    %1014 = vdwg.mxu0
    %1015 = vmatpush.bf16.msra.mxu0 %v413
    %1016 = vmatpush.bf16.msra.mxu0 %v409
    %1017 = vmatpush.bf16.msra.mxu0 %v405
    %1018 = vmatpush.bf16.msra.mxu0 %v401
    %1019 = vmatpush.bf16.msra.mxu0 %v397
    %1020 = vmatpush.bf16.msra.mxu0 %v393
    %1021 = vmatpush.bf16.msra.mxu0 %v389
    %1022 = vmatpush.bf16.msra.mxu0 %v385
    %1023 = vmatmul.bf16.gmra.mxu0 %v874
    %v1024 = vpop.f32.mrf.mxu0
    %v1025 = vadd.f32 %v1012, %v1024
    %v1026 = vpop.f32.mrf.mxu0
    %1027 = vdwg.mxu0
    %v1028 = vxor.u32 %v947, 2147483648
    %v1029 = vmul.f32 %v1028, 1.442695
    %v1030 = vpow.pop %v1029
    %v1031 = vadd.f32 %v1030, 1.0
    %v1032 = vrcp.pop %v1031
    %v1033 = vmul.f32 %v1031, %v1032
    %v1034 = vsub.f32 1.0, %v1033
    %v1035 = vmul.f32 %v1032, %v1034
    %v1036 = vadd.f32 %v1032, %v1035
    %vm1037 = vweird.f32 %v1031
    %vm1038 = vweird.f32 %v1032
    %vm1039 = vmor %vm1037, %vm1038
    %v1040 = vsel %vm1039, %v1032, %v1036
    %v1041 = vand.u32 2147483647, %v1031
    %vm1042 = vcmp.eq.f32.partialorder %v1041, 8.507059e+37
    %v1043 = vand.u32 %v1031, 2147483648
    %v1044 = vor.u32 1.1754944e-38, %v1043
    %v1045 = vsel %vm1042, %v1044, %v1040
    %v1046 = vmul.f32 1.0, %v1045
    %v1047 = vxor.u32 %v973, 2147483648
    %v1048 = vmul.f32 %v1047, 1.442695
    %v1049 = vpow.pop %v1048
    %v1050 = vadd.f32 %v1049, 1.0
    %v1051 = vrcp.pop %v1050
    %v1052 = vmul.f32 %v1050, %v1051
    %v1053 = vsub.f32 1.0, %v1052
    %v1054 = vmul.f32 %v1051, %v1053
    %v1055 = vadd.f32 %v1051, %v1054
    %vm1056 = vweird.f32 %v1050
    %vm1057 = vweird.f32 %v1051
    %vm1058 = vmor %vm1056, %vm1057
    %v1059 = vsel %vm1058, %v1051, %v1055
    %v1060 = vand.u32 2147483647, %v1050
    %vm1061 = vcmp.eq.f32.partialorder %v1060, 8.507059e+37
    %v1062 = vand.u32 %v1050, 2147483648
    %v1063 = vor.u32 1.1754944e-38, %v1062
    %v1064 = vsel %vm1061, %v1063, %v1059
    %v1065 = vmul.f32 1.0, %v1064
    %v1066 = vmul.f32 %v1046, %v1025
    %v1067 = vadd.f32 %v999, %v1066
    %v1068 = vtanh.pop %v1067
    %v1069 = vsub.f32 1.0, %v1065
    %v1070 = vmul.f32 %v1069, %v1068
    %v1071 = vmul.f32 %v1065, %v873
    %v1072 = vadd.f32 %v1070, %v1071
    %v1073 = vpack.c.bf16 %v1072, %v1072
    %1074 = vmatpush.bf16.msra.mxu0 %v667
    %1075 = vmatpush.bf16.msra.mxu0 %v666
    %1076 = vmatpush.bf16.msra.mxu0 %v665
    %1077 = vmatpush.bf16.msra.mxu0 %v664
    %1078 = vmatpush.bf16.msra.mxu0 %v663
    %1079 = vmatpush.bf16.msra.mxu0 %v662
    %1080 = vmatpush.bf16.msra.mxu0 %v661
    %1081 = vmatpush.bf16.msra.mxu0 %v660
    %1082 = vmatmul.bf16.gmra.mxu0 %v1073
    %v1083 = vpop.f32.mrf.mxu0
    %v1084 = vadd.f32 %v148, %v1083
    %v1085 = vpop.f32.mrf.mxu0
    %1086 = vdwg.mxu0
    %v1087 = vsel %vm689, %v1084, -inf
    %1088 = vmax.xlane.f32.xlu0 %v1087
    %v1089 = vpop.xlane.xlu0 %1088
    %v1090 = vsub.f32 %v1084, %v1089
    %v1091 = vmul.f32 %v1090, 1.442695
    %v1092 = vpow.pop %v1091
    %v1093 = vsel %vm689, %v1092, 0.0
    %1094 = vadd.xlane.f32.xlu0 %v1093
    %v1095 = vpop.xlane.xlu0 %1094
    %v1096 = vlog2.pop %v1095
    %v1097 = vmul.f32 %v1096, 0.6931472
    %v1098 = vadd.f32 %v1097, %v1089
    %v1099 = vsub.f32 %v1084, %v1098
    %s1100 = scalar_lea.vmem [#allocation8], 4
    %1101 = vst [vmem:[%s1100] sm:$0x3] %v1099
    %vm1102 = vcmp.ge.f32.partialorder %v1084, %v1089
    %v1103 = vsel %vm1102, %v151, 128
    %v1104 = vsel %vm689, %v1103, 2147483647
    %v1105 = vand.u32 %v1104, 65535
    %v1106 = vshra.s32 %v1104, 16
    %v1107 = vcvt.s32.f32 %v1105
    %v1108 = vcvt.s32.f32 %v1106
    %1109 = vmin.xlane.f32.xlu0 %v1108
    %v1110 = vpop.xlane.xlu0 %1109
    %vm1111 = vcmp.eq.f32.partialorder %v1108, %v1110
    %v1112 = vsel %vm1111, %v1107, inf
    %1113 = vmin.xlane.f32.xlu0 %v1112
    %v1114 = vpop.xlane.xlu0 %1113
    %v1115 = vcvt.f32.s32 %v1114
    %v1116 = vcvt.f32.s32 %v1110
    %v1117 = vshll.u32 %v1116, 16
    %v1118 = vadd.s32 %v1117, %v1115
    %vm1119 = vcmp.eq.s32.totalorder %v151, %v1118
    %v1120 = vsel %vm1119, 1, 0
    %v1121 = vcvt.s32.f32 %v1120
    %v1122 = vpack.c.bf16 %v1121, %v1121
    %1123 = vmatpush.bf16.msra.mxu0 %v378
    %1124 = vmatpush.bf16.msra.mxu0 %v374
    %1125 = vmatpush.bf16.msra.mxu0 %v370
    %1126 = vmatpush.bf16.msra.mxu0 %v366
    %1127 = vmatpush.bf16.msra.mxu0 %v362
    %1128 = vmatpush.bf16.msra.mxu0 %v358
    %1129 = vmatpush.bf16.msra.mxu0 %v354
    %1130 = vmatpush.bf16.msra.mxu0 %v350
    %1131 = vmatmul.bf16.gmra.mxu0 %v1122
    %v1132 = vpop.f32.mrf.mxu0
    %v1133 = vadd.f32 0.0, %v1132
    %v1134 = vpop.f32.mrf.mxu0
    %1135 = vdwg.mxu0
    %1136 = vmatpush.bf16.msra.mxu0 %v410
    %1137 = vmatpush.bf16.msra.mxu0 %v406
    %1138 = vmatpush.bf16.msra.mxu0 %v402
    %1139 = vmatpush.bf16.msra.mxu0 %v398
    %1140 = vmatpush.bf16.msra.mxu0 %v394
    %1141 = vmatpush.bf16.msra.mxu0 %v390
    %1142 = vmatpush.bf16.msra.mxu0 %v386
    %1143 = vmatpush.bf16.msra.mxu0 %v382
    %1144 = vmatmul.bf16.gmra.mxu0 %v1073
    %v1145 = vpop.f32.mrf.mxu0
    %v1146 = vadd.f32 %v1133, %v1145
    %v1147 = vpop.f32.mrf.mxu0
    %1148 = vdwg.mxu0
    %1149 = vmatpush.bf16.msra.mxu0 %v379
    %1150 = vmatpush.bf16.msra.mxu0 %v375
    %1151 = vmatpush.bf16.msra.mxu0 %v371
    %1152 = vmatpush.bf16.msra.mxu0 %v367
    %1153 = vmatpush.bf16.msra.mxu0 %v363
    %1154 = vmatpush.bf16.msra.mxu0 %v359
    %1155 = vmatpush.bf16.msra.mxu0 %v355
    %1156 = vmatpush.bf16.msra.mxu0 %v351
    %1157 = vmatmul.bf16.gmra.mxu0 %v1122
    %v1158 = vpop.f32.mrf.mxu0
    %v1159 = vadd.f32 0.0, %v1158
    %v1160 = vpop.f32.mrf.mxu0
    %1161 = vdwg.mxu0
    %1162 = vmatpush.bf16.msra.mxu0 %v411
    %1163 = vmatpush.bf16.msra.mxu0 %v407
    %1164 = vmatpush.bf16.msra.mxu0 %v403
    %1165 = vmatpush.bf16.msra.mxu0 %v399
    %1166 = vmatpush.bf16.msra.mxu0 %v395
    %1167 = vmatpush.bf16.msra.mxu0 %v391
    %1168 = vmatpush.bf16.msra.mxu0 %v387
    %1169 = vmatpush.bf16.msra.mxu0 %v383
    %1170 = vmatmul.bf16.gmra.mxu0 %v1073
    %v1171 = vpop.f32.mrf.mxu0
    %v1172 = vadd.f32 %v1159, %v1171
    %v1173 = vpop.f32.mrf.mxu0
    %1174 = vdwg.mxu0
    %1175 = vmatpush.bf16.msra.mxu0 %v380
    %1176 = vmatpush.bf16.msra.mxu0 %v376
    %1177 = vmatpush.bf16.msra.mxu0 %v372
    %1178 = vmatpush.bf16.msra.mxu0 %v368
    %1179 = vmatpush.bf16.msra.mxu0 %v364
    %1180 = vmatpush.bf16.msra.mxu0 %v360
    %1181 = vmatpush.bf16.msra.mxu0 %v356
    %1182 = vmatpush.bf16.msra.mxu0 %v352
    %1183 = vmatmul.bf16.gmra.mxu0 %v1122
    %v1184 = vpop.f32.mrf.mxu0
    %v1185 = vadd.f32 0.0, %v1184
    %v1186 = vpop.f32.mrf.mxu0
    %1187 = vdwg.mxu0
    %1188 = vmatpush.bf16.msra.mxu0 %v412
    %1189 = vmatpush.bf16.msra.mxu0 %v408
    %1190 = vmatpush.bf16.msra.mxu0 %v404
    %1191 = vmatpush.bf16.msra.mxu0 %v400
    %1192 = vmatpush.bf16.msra.mxu0 %v396
    %1193 = vmatpush.bf16.msra.mxu0 %v392
    %1194 = vmatpush.bf16.msra.mxu0 %v388
    %1195 = vmatpush.bf16.msra.mxu0 %v384
    %1196 = vmatmul.bf16.gmra.mxu0 %v1073
    %v1197 = vpop.f32.mrf.mxu0
    %v1198 = vadd.f32 %v1185, %v1197
    %v1199 = vpop.f32.mrf.mxu0
    %1200 = vdwg.mxu0
    %1201 = vmatpush.bf16.msra.mxu0 %v381
    %1202 = vmatpush.bf16.msra.mxu0 %v377
    %1203 = vmatpush.bf16.msra.mxu0 %v373
    %1204 = vmatpush.bf16.msra.mxu0 %v369
    %1205 = vmatpush.bf16.msra.mxu0 %v365
    %1206 = vmatpush.bf16.msra.mxu0 %v361
    %1207 = vmatpush.bf16.msra.mxu0 %v357
    %1208 = vmatpush.bf16.msra.mxu0 %v353
    %1209 = vmatmul.bf16.gmra.mxu0 %v1122
    %v1210 = vpop.f32.mrf.mxu0
    %v1211 = vadd.f32 0.0, %v1210
    %v1212 = vpop.f32.mrf.mxu0
    %1213 = vdwg.mxu0
    %1214 = vmatpush.bf16.msra.mxu0 %v413
    %1215 = vmatpush.bf16.msra.mxu0 %v409
    %1216 = vmatpush.bf16.msra.mxu0 %v405
    %1217 = vmatpush.bf16.msra.mxu0 %v401
    %1218 = vmatpush.bf16.msra.mxu0 %v397
    %1219 = vmatpush.bf16.msra.mxu0 %v393
    %1220 = vmatpush.bf16.msra.mxu0 %v389
    %1221 = vmatpush.bf16.msra.mxu0 %v385
    %1222 = vmatmul.bf16.gmra.mxu0 %v1073
    %v1223 = vpop.f32.mrf.mxu0
    %v1224 = vadd.f32 %v1211, %v1223
    %v1225 = vpop.f32.mrf.mxu0
    %1226 = vdwg.mxu0
    %v1227 = vxor.u32 %v1146, 2147483648
    %v1228 = vmul.f32 %v1227, 1.442695
    %v1229 = vpow.pop %v1228
    %v1230 = vadd.f32 %v1229, 1.0
    %v1231 = vrcp.pop %v1230
    %v1232 = vmul.f32 %v1230, %v1231
    %v1233 = vsub.f32 1.0, %v1232
    %v1234 = vmul.f32 %v1231, %v1233
    %v1235 = vadd.f32 %v1231, %v1234
    %vm1236 = vweird.f32 %v1230
    %vm1237 = vweird.f32 %v1231
    %vm1238 = vmor %vm1236, %vm1237
    %v1239 = vsel %vm1238, %v1231, %v1235
    %v1240 = vand.u32 2147483647, %v1230
    %vm1241 = vcmp.eq.f32.partialorder %v1240, 8.507059e+37
    %v1242 = vand.u32 %v1230, 2147483648
    %v1243 = vor.u32 1.1754944e-38, %v1242
    %v1244 = vsel %vm1241, %v1243, %v1239
    %v1245 = vmul.f32 1.0, %v1244
    %v1246 = vxor.u32 %v1172, 2147483648
    %v1247 = vmul.f32 %v1246, 1.442695
    %v1248 = vpow.pop %v1247
    %v1249 = vadd.f32 %v1248, 1.0
    %v1250 = vrcp.pop %v1249
    %v1251 = vmul.f32 %v1249, %v1250
    %v1252 = vsub.f32 1.0, %v1251
    %v1253 = vmul.f32 %v1250, %v1252
    %v1254 = vadd.f32 %v1250, %v1253
    %vm1255 = vweird.f32 %v1249
    %vm1256 = vweird.f32 %v1250
    %vm1257 = vmor %vm1255, %vm1256
    %v1258 = vsel %vm1257, %v1250, %v1254
    %v1259 = vand.u32 2147483647, %v1249
    %vm1260 = vcmp.eq.f32.partialorder %v1259, 8.507059e+37
    %v1261 = vand.u32 %v1249, 2147483648
    %v1262 = vor.u32 1.1754944e-38, %v1261
    %v1263 = vsel %vm1260, %v1262, %v1258
    %v1264 = vmul.f32 1.0, %v1263
    %v1265 = vmul.f32 %v1245, %v1224
    %v1266 = vadd.f32 %v1198, %v1265
    %v1267 = vtanh.pop %v1266
    %v1268 = vsub.f32 1.0, %v1264
    %v1269 = vmul.f32 %v1268, %v1267
    %v1270 = vmul.f32 %v1264, %v1072
    %v1271 = vadd.f32 %v1269, %v1270
    %v1272 = vpack.c.bf16 %v1271, %v1271
    %1273 = vmatpush.bf16.msra.mxu0 %v667
    %1274 = vmatpush.bf16.msra.mxu0 %v666
    %1275 = vmatpush.bf16.msra.mxu0 %v665
    %1276 = vmatpush.bf16.msra.mxu0 %v664
    %1277 = vmatpush.bf16.msra.mxu0 %v663
    %1278 = vmatpush.bf16.msra.mxu0 %v662
    %1279 = vmatpush.bf16.msra.mxu0 %v661
    %1280 = vmatpush.bf16.msra.mxu0 %v660
    %1281 = vmatmul.bf16.gmra.mxu0 %v1272
    %v1282 = vpop.f32.mrf.mxu0
    %v1283 = vadd.f32 %v148, %v1282
    %v1284 = vpop.f32.mrf.mxu0
    %1285 = vdwg.mxu0
    %v1286 = vsel %vm689, %v1283, -inf
    %1287 = vmax.xlane.f32.xlu0 %v1286
    %v1288 = vpop.xlane.xlu0 %1287
    %v1289 = vsub.f32 %v1283, %v1288
    %v1290 = vmul.f32 %v1289, 1.442695
    %v1291 = vpow.pop %v1290
    %v1292 = vsel %vm689, %v1291, 0.0
    %1293 = vadd.xlane.f32.xlu0 %v1292
    %v1294 = vpop.xlane.xlu0 %1293
    %v1295 = vlog2.pop %v1294
    %v1296 = vmul.f32 %v1295, 0.6931472
    %v1297 = vadd.f32 %v1296, %v1288
    %v1298 = vsub.f32 %v1283, %v1297
    %s1299 = scalar_lea.vmem [#allocation8], 6
    %1300 = vst [vmem:[%s1299] sm:$0x3] %v1298
    %vm1301 = vcmp.ge.f32.partialorder %v1283, %v1288
    %v1302 = vsel %vm1301, %v151, 128
    %v1303 = vsel %vm689, %v1302, 2147483647
    %v1304 = vand.u32 %v1303, 65535
    %v1305 = vshra.s32 %v1303, 16
    %v1306 = vcvt.s32.f32 %v1304
    %v1307 = vcvt.s32.f32 %v1305
    %1308 = vmin.xlane.f32.xlu0 %v1307
    %v1309 = vpop.xlane.xlu0 %1308
    %vm1310 = vcmp.eq.f32.partialorder %v1307, %v1309
    %v1311 = vsel %vm1310, %v1306, inf
    %1312 = vmin.xlane.f32.xlu0 %v1311
    %v1313 = vpop.xlane.xlu0 %1312
    %v1314 = vcvt.f32.s32 %v1313
    %v1315 = vcvt.f32.s32 %v1309
    %v1316 = vshll.u32 %v1315, 16
    %v1317 = vadd.s32 %v1316, %v1314
    %vm1318 = vcmp.eq.s32.totalorder %v151, %v1317
    %v1319 = vsel %vm1318, 1, 0
    %v1320 = vcvt.s32.f32 %v1319
    %v1321 = vpack.c.bf16 %v1320, %v1320
    %1322 = vmatpush.bf16.msra.mxu0 %v378
    %1323 = vmatpush.bf16.msra.mxu0 %v374
    %1324 = vmatpush.bf16.msra.mxu0 %v370
    %1325 = vmatpush.bf16.msra.mxu0 %v366
    %1326 = vmatpush.bf16.msra.mxu0 %v362
    %1327 = vmatpush.bf16.msra.mxu0 %v358
    %1328 = vmatpush.bf16.msra.mxu0 %v354
    %1329 = vmatpush.bf16.msra.mxu0 %v350
    %1330 = vmatmul.bf16.gmra.mxu0 %v1321
    %v1331 = vpop.f32.mrf.mxu0
    %v1332 = vadd.f32 0.0, %v1331
    %v1333 = vpop.f32.mrf.mxu0
    %1334 = vdwg.mxu0
    %1335 = vmatpush.bf16.msra.mxu0 %v410
    %1336 = vmatpush.bf16.msra.mxu0 %v406
    %1337 = vmatpush.bf16.msra.mxu0 %v402
    %1338 = vmatpush.bf16.msra.mxu0 %v398
    %1339 = vmatpush.bf16.msra.mxu0 %v394
    %1340 = vmatpush.bf16.msra.mxu0 %v390
    %1341 = vmatpush.bf16.msra.mxu0 %v386
    %1342 = vmatpush.bf16.msra.mxu0 %v382
    %1343 = vmatmul.bf16.gmra.mxu0 %v1272
    %v1344 = vpop.f32.mrf.mxu0
    %v1345 = vadd.f32 %v1332, %v1344
    %v1346 = vpop.f32.mrf.mxu0
    %1347 = vdwg.mxu0
    %1348 = vmatpush.bf16.msra.mxu0 %v379
    %1349 = vmatpush.bf16.msra.mxu0 %v375
    %1350 = vmatpush.bf16.msra.mxu0 %v371
    %1351 = vmatpush.bf16.msra.mxu0 %v367
    %1352 = vmatpush.bf16.msra.mxu0 %v363
    %1353 = vmatpush.bf16.msra.mxu0 %v359
    %1354 = vmatpush.bf16.msra.mxu0 %v355
    %1355 = vmatpush.bf16.msra.mxu0 %v351
    %1356 = vmatmul.bf16.gmra.mxu0 %v1321
    %v1357 = vpop.f32.mrf.mxu0
    %v1358 = vadd.f32 0.0, %v1357
    %v1359 = vpop.f32.mrf.mxu0
    %1360 = vdwg.mxu0
    %1361 = vmatpush.bf16.msra.mxu0 %v411
    %1362 = vmatpush.bf16.msra.mxu0 %v407
    %1363 = vmatpush.bf16.msra.mxu0 %v403
    %1364 = vmatpush.bf16.msra.mxu0 %v399
    %1365 = vmatpush.bf16.msra.mxu0 %v395
    %1366 = vmatpush.bf16.msra.mxu0 %v391
    %1367 = vmatpush.bf16.msra.mxu0 %v387
    %1368 = vmatpush.bf16.msra.mxu0 %v383
    %1369 = vmatmul.bf16.gmra.mxu0 %v1272
    %v1370 = vpop.f32.mrf.mxu0
    %v1371 = vadd.f32 %v1358, %v1370
    %v1372 = vpop.f32.mrf.mxu0
    %1373 = vdwg.mxu0
    %1374 = vmatpush.bf16.msra.mxu0 %v380
    %1375 = vmatpush.bf16.msra.mxu0 %v376
    %1376 = vmatpush.bf16.msra.mxu0 %v372
    %1377 = vmatpush.bf16.msra.mxu0 %v368
    %1378 = vmatpush.bf16.msra.mxu0 %v364
    %1379 = vmatpush.bf16.msra.mxu0 %v360
    %1380 = vmatpush.bf16.msra.mxu0 %v356
    %1381 = vmatpush.bf16.msra.mxu0 %v352
    %1382 = vmatmul.bf16.gmra.mxu0 %v1321
    %v1383 = vpop.f32.mrf.mxu0
    %v1384 = vadd.f32 0.0, %v1383
    %v1385 = vpop.f32.mrf.mxu0
    %1386 = vdwg.mxu0
    %1387 = vmatpush.bf16.msra.mxu0 %v412
    %1388 = vmatpush.bf16.msra.mxu0 %v408
    %1389 = vmatpush.bf16.msra.mxu0 %v404
    %1390 = vmatpush.bf16.msra.mxu0 %v400
    %1391 = vmatpush.bf16.msra.mxu0 %v396
    %1392 = vmatpush.bf16.msra.mxu0 %v392
    %1393 = vmatpush.bf16.msra.mxu0 %v388
    %1394 = vmatpush.bf16.msra.mxu0 %v384
    %1395 = vmatmul.bf16.gmra.mxu0 %v1272
    %v1396 = vpop.f32.mrf.mxu0
    %v1397 = vadd.f32 %v1384, %v1396
    %v1398 = vpop.f32.mrf.mxu0
    %1399 = vdwg.mxu0
    %1400 = vmatpush.bf16.msra.mxu0 %v381
    %1401 = vmatpush.bf16.msra.mxu0 %v377
    %1402 = vmatpush.bf16.msra.mxu0 %v373
    %1403 = vmatpush.bf16.msra.mxu0 %v369
    %1404 = vmatpush.bf16.msra.mxu0 %v365
    %1405 = vmatpush.bf16.msra.mxu0 %v361
    %1406 = vmatpush.bf16.msra.mxu0 %v357
    %1407 = vmatpush.bf16.msra.mxu0 %v353
    %1408 = vmatmul.bf16.gmra.mxu0 %v1321
    %v1409 = vpop.f32.mrf.mxu0
    %v1410 = vadd.f32 0.0, %v1409
    %v1411 = vpop.f32.mrf.mxu0
    %1412 = vdwg.mxu0
    %1413 = vmatpush.bf16.msra.mxu0 %v413
    %1414 = vmatpush.bf16.msra.mxu0 %v409
    %1415 = vmatpush.bf16.msra.mxu0 %v405
    %1416 = vmatpush.bf16.msra.mxu0 %v401
    %1417 = vmatpush.bf16.msra.mxu0 %v397
    %1418 = vmatpush.bf16.msra.mxu0 %v393
    %1419 = vmatpush.bf16.msra.mxu0 %v389
    %1420 = vmatpush.bf16.msra.mxu0 %v385
    %1421 = vmatmul.bf16.gmra.mxu0 %v1272
    %v1422 = vpop.f32.mrf.mxu0
    %v1423 = vadd.f32 %v1410, %v1422
    %v1424 = vpop.f32.mrf.mxu0
    %1425 = vdwg.mxu0
    %v1426 = vxor.u32 %v1345, 2147483648
    %v1427 = vmul.f32 %v1426, 1.442695
    %v1428 = vpow.pop %v1427
    %v1429 = vadd.f32 %v1428, 1.0
    %v1430 = vrcp.pop %v1429
    %v1431 = vmul.f32 %v1429, %v1430
    %v1432 = vsub.f32 1.0, %v1431
    %v1433 = vmul.f32 %v1430, %v1432
    %v1434 = vadd.f32 %v1430, %v1433
    %vm1435 = vweird.f32 %v1429
    %vm1436 = vweird.f32 %v1430
    %vm1437 = vmor %vm1435, %vm1436
    %v1438 = vsel %vm1437, %v1430, %v1434
    %v1439 = vand.u32 2147483647, %v1429
    %vm1440 = vcmp.eq.f32.partialorder %v1439, 8.507059e+37
    %v1441 = vand.u32 %v1429, 2147483648
    %v1442 = vor.u32 1.1754944e-38, %v1441
    %v1443 = vsel %vm1440, %v1442, %v1438
    %v1444 = vmul.f32 1.0, %v1443
    %v1445 = vxor.u32 %v1371, 2147483648
    %v1446 = vmul.f32 %v1445, 1.442695
    %v1447 = vpow.pop %v1446
    %v1448 = vadd.f32 %v1447, 1.0
    %v1449 = vrcp.pop %v1448
    %v1450 = vmul.f32 %v1448, %v1449
    %v1451 = vsub.f32 1.0, %v1450
    %v1452 = vmul.f32 %v1449, %v1451
    %v1453 = vadd.f32 %v1449, %v1452
    %vm1454 = vweird.f32 %v1448
    %vm1455 = vweird.f32 %v1449
    %vm1456 = vmor %vm1454, %vm1455
    %v1457 = vsel %vm1456, %v1449, %v1453
    %v1458 = vand.u32 2147483647, %v1448
    %vm1459 = vcmp.eq.f32.partialorder %v1458, 8.507059e+37
    %v1460 = vand.u32 %v1448, 2147483648
    %v1461 = vor.u32 1.1754944e-38, %v1460
    %v1462 = vsel %vm1459, %v1461, %v1457
    %v1463 = vmul.f32 1.0, %v1462
    %v1464 = vmul.f32 %v1444, %v1423
    %v1465 = vadd.f32 %v1397, %v1464
    %v1466 = vtanh.pop %v1465
    %v1467 = vsub.f32 1.0, %v1463
    %v1468 = vmul.f32 %v1467, %v1466
    %v1469 = vmul.f32 %v1463, %v1271
    %v1470 = vadd.f32 %v1468, %v1469
    %v1471 = vpack.c.bf16 %v1470, %v1470
    %1472 = vmatpush.bf16.msra.mxu0 %v667
    %1473 = vmatpush.bf16.msra.mxu0 %v666
    %1474 = vmatpush.bf16.msra.mxu0 %v665
    %1475 = vmatpush.bf16.msra.mxu0 %v664
    %1476 = vmatpush.bf16.msra.mxu0 %v663
    %1477 = vmatpush.bf16.msra.mxu0 %v662
    %1478 = vmatpush.bf16.msra.mxu0 %v661
    %1479 = vmatpush.bf16.msra.mxu0 %v660
    %1480 = vmatmul.bf16.gmra.mxu0 %v1471
    %v1481 = vpop.f32.mrf.mxu0
    %v1482 = vadd.f32 %v148, %v1481
    %v1483 = vpop.f32.mrf.mxu0
    %1484 = vdwg.mxu0
    %v1485 = vsel %vm689, %v1482, -inf
    %1486 = vmax.xlane.f32.xlu0 %v1485
    %v1487 = vpop.xlane.xlu0 %1486
    %v1488 = vsub.f32 %v1482, %v1487
    %v1489 = vmul.f32 %v1488, 1.442695
    %v1490 = vpow.pop %v1489
    %v1491 = vsel %vm689, %v1490, 0.0
    %1492 = vadd.xlane.f32.xlu0 %v1491
    %v1493 = vpop.xlane.xlu0 %1492
    %v1494 = vlog2.pop %v1493
    %v1495 = vmul.f32 %v1494, 0.6931472
    %v1496 = vadd.f32 %v1495, %v1487
    %v1497 = vsub.f32 %v1482, %v1496
    %s1498 = scalar_lea.vmem [#allocation8], 8
    %1499 = vst [vmem:[%s1498] sm:$0x3] %v1497
    %vm1500 = vcmp.ge.f32.partialorder %v1482, %v1487
    %v1501 = vsel %vm1500, %v151, 128
    %v1502 = vsel %vm689, %v1501, 2147483647
    %v1503 = vand.u32 %v1502, 65535
    %v1504 = vshra.s32 %v1502, 16
    %v1505 = vcvt.s32.f32 %v1503
    %v1506 = vcvt.s32.f32 %v1504
    %1507 = vmin.xlane.f32.xlu0 %v1506
    %v1508 = vpop.xlane.xlu0 %1507
    %vm1509 = vcmp.eq.f32.partialorder %v1506, %v1508
    %v1510 = vsel %vm1509, %v1505, inf
    %1511 = vmin.xlane.f32.xlu0 %v1510
    %v1512 = vpop.xlane.xlu0 %1511
    %v1513 = vcvt.f32.s32 %v1512
    %v1514 = vcvt.f32.s32 %v1508
    %v1515 = vshll.u32 %v1514, 16
    %v1516 = vadd.s32 %v1515, %v1513
    %vm1517 = vcmp.eq.s32.totalorder %v151, %v1516
    %v1518 = vsel %vm1517, 1, 0
    %v1519 = vcvt.s32.f32 %v1518
    %v1520 = vpack.c.bf16 %v1519, %v1519
    %1521 = vmatpush.bf16.msra.mxu0 %v378
    %1522 = vmatpush.bf16.msra.mxu0 %v374
    %1523 = vmatpush.bf16.msra.mxu0 %v370
    %1524 = vmatpush.bf16.msra.mxu0 %v366
    %1525 = vmatpush.bf16.msra.mxu0 %v362
    %1526 = vmatpush.bf16.msra.mxu0 %v358
    %1527 = vmatpush.bf16.msra.mxu0 %v354
    %1528 = vmatpush.bf16.msra.mxu0 %v350
    %1529 = vmatmul.bf16.gmra.mxu0 %v1520
    %v1530 = vpop.f32.mrf.mxu0
    %v1531 = vadd.f32 0.0, %v1530
    %v1532 = vpop.f32.mrf.mxu0
    %1533 = vdwg.mxu0
    %1534 = vmatpush.bf16.msra.mxu0 %v410
    %1535 = vmatpush.bf16.msra.mxu0 %v406
    %1536 = vmatpush.bf16.msra.mxu0 %v402
    %1537 = vmatpush.bf16.msra.mxu0 %v398
    %1538 = vmatpush.bf16.msra.mxu0 %v394
    %1539 = vmatpush.bf16.msra.mxu0 %v390
    %1540 = vmatpush.bf16.msra.mxu0 %v386
    %1541 = vmatpush.bf16.msra.mxu0 %v382
    %1542 = vmatmul.bf16.gmra.mxu0 %v1471
    %v1543 = vpop.f32.mrf.mxu0
    %v1544 = vadd.f32 %v1531, %v1543
    %v1545 = vpop.f32.mrf.mxu0
    %1546 = vdwg.mxu0
    %1547 = vmatpush.bf16.msra.mxu0 %v379
    %1548 = vmatpush.bf16.msra.mxu0 %v375
    %1549 = vmatpush.bf16.msra.mxu0 %v371
    %1550 = vmatpush.bf16.msra.mxu0 %v367
    %1551 = vmatpush.bf16.msra.mxu0 %v363
    %1552 = vmatpush.bf16.msra.mxu0 %v359
    %1553 = vmatpush.bf16.msra.mxu0 %v355
    %1554 = vmatpush.bf16.msra.mxu0 %v351
    %1555 = vmatmul.bf16.gmra.mxu0 %v1520
    %v1556 = vpop.f32.mrf.mxu0
    %v1557 = vadd.f32 0.0, %v1556
    %v1558 = vpop.f32.mrf.mxu0
    %1559 = vdwg.mxu0
    %1560 = vmatpush.bf16.msra.mxu0 %v411
    %1561 = vmatpush.bf16.msra.mxu0 %v407
    %1562 = vmatpush.bf16.msra.mxu0 %v403
    %1563 = vmatpush.bf16.msra.mxu0 %v399
    %1564 = vmatpush.bf16.msra.mxu0 %v395
    %1565 = vmatpush.bf16.msra.mxu0 %v391
    %1566 = vmatpush.bf16.msra.mxu0 %v387
    %1567 = vmatpush.bf16.msra.mxu0 %v383
    %1568 = vmatmul.bf16.gmra.mxu0 %v1471
    %v1569 = vpop.f32.mrf.mxu0
    %v1570 = vadd.f32 %v1557, %v1569
    %v1571 = vpop.f32.mrf.mxu0
    %1572 = vdwg.mxu0
    %1573 = vmatpush.bf16.msra.mxu0 %v380
    %1574 = vmatpush.bf16.msra.mxu0 %v376
    %1575 = vmatpush.bf16.msra.mxu0 %v372
    %1576 = vmatpush.bf16.msra.mxu0 %v368
    %1577 = vmatpush.bf16.msra.mxu0 %v364
    %1578 = vmatpush.bf16.msra.mxu0 %v360
    %1579 = vmatpush.bf16.msra.mxu0 %v356
    %1580 = vmatpush.bf16.msra.mxu0 %v352
    %1581 = vmatmul.bf16.gmra.mxu0 %v1520
    %v1582 = vpop.f32.mrf.mxu0
    %v1583 = vadd.f32 0.0, %v1582
    %v1584 = vpop.f32.mrf.mxu0
    %1585 = vdwg.mxu0
    %1586 = vmatpush.bf16.msra.mxu0 %v412
    %1587 = vmatpush.bf16.msra.mxu0 %v408
    %1588 = vmatpush.bf16.msra.mxu0 %v404
    %1589 = vmatpush.bf16.msra.mxu0 %v400
    %1590 = vmatpush.bf16.msra.mxu0 %v396
    %1591 = vmatpush.bf16.msra.mxu0 %v392
    %1592 = vmatpush.bf16.msra.mxu0 %v388
    %1593 = vmatpush.bf16.msra.mxu0 %v384
    %1594 = vmatmul.bf16.gmra.mxu0 %v1471
    %v1595 = vpop.f32.mrf.mxu0
    %v1596 = vadd.f32 %v1583, %v1595
    %v1597 = vpop.f32.mrf.mxu0
    %1598 = vdwg.mxu0
    %1599 = vmatpush.bf16.msra.mxu0 %v381
    %1600 = vmatpush.bf16.msra.mxu0 %v377
    %1601 = vmatpush.bf16.msra.mxu0 %v373
    %1602 = vmatpush.bf16.msra.mxu0 %v369
    %1603 = vmatpush.bf16.msra.mxu0 %v365
    %1604 = vmatpush.bf16.msra.mxu0 %v361
    %1605 = vmatpush.bf16.msra.mxu0 %v357
    %1606 = vmatpush.bf16.msra.mxu0 %v353
    %1607 = vmatmul.bf16.gmra.mxu0 %v1520
    %v1608 = vpop.f32.mrf.mxu0
    %v1609 = vadd.f32 0.0, %v1608
    %v1610 = vpop.f32.mrf.mxu0
    %1611 = vdwg.mxu0
    %1612 = vmatpush.bf16.msra.mxu0 %v413
    %1613 = vmatpush.bf16.msra.mxu0 %v409
    %1614 = vmatpush.bf16.msra.mxu0 %v405
    %1615 = vmatpush.bf16.msra.mxu0 %v401
    %1616 = vmatpush.bf16.msra.mxu0 %v397
    %1617 = vmatpush.bf16.msra.mxu0 %v393
    %1618 = vmatpush.bf16.msra.mxu0 %v389
    %1619 = vmatpush.bf16.msra.mxu0 %v385
    %1620 = vmatmul.bf16.gmra.mxu0 %v1471
    %v1621 = vpop.f32.mrf.mxu0
    %v1622 = vadd.f32 %v1609, %v1621
    %v1623 = vpop.f32.mrf.mxu0
    %1624 = vdwg.mxu0
    %v1625 = vxor.u32 %v1544, 2147483648
    %v1626 = vmul.f32 %v1625, 1.442695
    %v1627 = vpow.pop %v1626
    %v1628 = vadd.f32 %v1627, 1.0
    %v1629 = vrcp.pop %v1628
    %v1630 = vmul.f32 %v1628, %v1629
    %v1631 = vsub.f32 1.0, %v1630
    %v1632 = vmul.f32 %v1629, %v1631
    %v1633 = vadd.f32 %v1629, %v1632
    %vm1634 = vweird.f32 %v1628
    %vm1635 = vweird.f32 %v1629
    %vm1636 = vmor %vm1634, %vm1635
    %v1637 = vsel %vm1636, %v1629, %v1633
    %v1638 = vand.u32 2147483647, %v1628
    %vm1639 = vcmp.eq.f32.partialorder %v1638, 8.507059e+37
    %v1640 = vand.u32 %v1628, 2147483648
    %v1641 = vor.u32 1.1754944e-38, %v1640
    %v1642 = vsel %vm1639, %v1641, %v1637
    %v1643 = vmul.f32 1.0, %v1642
    %v1644 = vxor.u32 %v1570, 2147483648
    %v1645 = vmul.f32 %v1644, 1.442695
    %v1646 = vpow.pop %v1645
    %v1647 = vadd.f32 %v1646, 1.0
    %v1648 = vrcp.pop %v1647
    %v1649 = vmul.f32 %v1647, %v1648
    %v1650 = vsub.f32 1.0, %v1649
    %v1651 = vmul.f32 %v1648, %v1650
    %v1652 = vadd.f32 %v1648, %v1651
    %vm1653 = vweird.f32 %v1647
    %vm1654 = vweird.f32 %v1648
    %vm1655 = vmor %vm1653, %vm1654
    %v1656 = vsel %vm1655, %v1648, %v1652
    %v1657 = vand.u32 2147483647, %v1647
    %vm1658 = vcmp.eq.f32.partialorder %v1657, 8.507059e+37
    %v1659 = vand.u32 %v1647, 2147483648
    %v1660 = vor.u32 1.1754944e-38, %v1659
    %v1661 = vsel %vm1658, %v1660, %v1656
    %v1662 = vmul.f32 1.0, %v1661
    %v1663 = vmul.f32 %v1643, %v1622
    %v1664 = vadd.f32 %v1596, %v1663
    %v1665 = vtanh.pop %v1664
    %v1666 = vsub.f32 1.0, %v1662
    %v1667 = vmul.f32 %v1666, %v1665
    %v1668 = vmul.f32 %v1662, %v1470
    %v1669 = vadd.f32 %v1667, %v1668
    %v1670 = vpack.c.bf16 %v1669, %v1669
    %1671 = vmatpush.bf16.msra.mxu0 %v667
    %1672 = vmatpush.bf16.msra.mxu0 %v666
    %1673 = vmatpush.bf16.msra.mxu0 %v665
    %1674 = vmatpush.bf16.msra.mxu0 %v664
    %1675 = vmatpush.bf16.msra.mxu0 %v663
    %1676 = vmatpush.bf16.msra.mxu0 %v662
    %1677 = vmatpush.bf16.msra.mxu0 %v661
    %1678 = vmatpush.bf16.msra.mxu0 %v660
    %1679 = vmatmul.bf16.gmra.mxu0 %v1670
    %v1680 = vpop.f32.mrf.mxu0
    %v1681 = vadd.f32 %v148, %v1680
    %v1682 = vpop.f32.mrf.mxu0
    %1683 = vdwg.mxu0
    %v1684 = vsel %vm689, %v1681, -inf
    %1685 = vmax.xlane.f32.xlu0 %v1684
    %v1686 = vpop.xlane.xlu0 %1685
    %v1687 = vsub.f32 %v1681, %v1686
    %v1688 = vmul.f32 %v1687, 1.442695
    %v1689 = vpow.pop %v1688
    %v1690 = vsel %vm689, %v1689, 0.0
    %1691 = vadd.xlane.f32.xlu0 %v1690
    %v1692 = vpop.xlane.xlu0 %1691
    %v1693 = vlog2.pop %v1692
    %v1694 = vmul.f32 %v1693, 0.6931472
    %v1695 = vadd.f32 %v1694, %v1686
    %v1696 = vsub.f32 %v1681, %v1695
    %s1697 = scalar_lea.vmem [#allocation8], 10
    %1698 = vst [vmem:[%s1697] sm:$0x3] %v1696
    %vm1699 = vcmp.ge.f32.partialorder %v1681, %v1686
    %v1700 = vsel %vm1699, %v151, 128
    %v1701 = vsel %vm689, %v1700, 2147483647
    %v1702 = vand.u32 %v1701, 65535
    %v1703 = vshra.s32 %v1701, 16
    %v1704 = vcvt.s32.f32 %v1702
    %v1705 = vcvt.s32.f32 %v1703
    %1706 = vmin.xlane.f32.xlu0 %v1705
    %v1707 = vpop.xlane.xlu0 %1706
    %vm1708 = vcmp.eq.f32.partialorder %v1705, %v1707
    %v1709 = vsel %vm1708, %v1704, inf
    %1710 = vmin.xlane.f32.xlu0 %v1709
    %v1711 = vpop.xlane.xlu0 %1710
    %v1712 = vcvt.f32.s32 %v1711
    %v1713 = vcvt.f32.s32 %v1707
    %v1714 = vshll.u32 %v1713, 16
    %v1715 = vadd.s32 %v1714, %v1712
    %vm1716 = vcmp.eq.s32.totalorder %v151, %v1715
    %v1717 = vsel %vm1716, 1, 0
    %v1718 = vcvt.s32.f32 %v1717
    %v1719 = vpack.c.bf16 %v1718, %v1718
    %1720 = vmatpush.bf16.msra.mxu0 %v378
    %1721 = vmatpush.bf16.msra.mxu0 %v374
    %1722 = vmatpush.bf16.msra.mxu0 %v370
    %1723 = vmatpush.bf16.msra.mxu0 %v366
    %1724 = vmatpush.bf16.msra.mxu0 %v362
    %1725 = vmatpush.bf16.msra.mxu0 %v358
    %1726 = vmatpush.bf16.msra.mxu0 %v354
    %1727 = vmatpush.bf16.msra.mxu0 %v350
    %1728 = vmatmul.bf16.gmra.mxu0 %v1719
    %v1729 = vpop.f32.mrf.mxu0
    %v1730 = vadd.f32 0.0, %v1729
    %v1731 = vpop.f32.mrf.mxu0
    %1732 = vdwg.mxu0
    %1733 = vmatpush.bf16.msra.mxu0 %v410
    %1734 = vmatpush.bf16.msra.mxu0 %v406
    %1735 = vmatpush.bf16.msra.mxu0 %v402
    %1736 = vmatpush.bf16.msra.mxu0 %v398
    %1737 = vmatpush.bf16.msra.mxu0 %v394
    %1738 = vmatpush.bf16.msra.mxu0 %v390
    %1739 = vmatpush.bf16.msra.mxu0 %v386
    %1740 = vmatpush.bf16.msra.mxu0 %v382
    %1741 = vmatmul.bf16.gmra.mxu0 %v1670
    %v1742 = vpop.f32.mrf.mxu0
    %v1743 = vadd.f32 %v1730, %v1742
    %v1744 = vpop.f32.mrf.mxu0
    %1745 = vdwg.mxu0
    %1746 = vmatpush.bf16.msra.mxu0 %v379
    %1747 = vmatpush.bf16.msra.mxu0 %v375
    %1748 = vmatpush.bf16.msra.mxu0 %v371
    %1749 = vmatpush.bf16.msra.mxu0 %v367
    %1750 = vmatpush.bf16.msra.mxu0 %v363
    %1751 = vmatpush.bf16.msra.mxu0 %v359
    %1752 = vmatpush.bf16.msra.mxu0 %v355
    %1753 = vmatpush.bf16.msra.mxu0 %v351
    %1754 = vmatmul.bf16.gmra.mxu0 %v1719
    %v1755 = vpop.f32.mrf.mxu0
    %v1756 = vadd.f32 0.0, %v1755
    %v1757 = vpop.f32.mrf.mxu0
    %1758 = vdwg.mxu0
    %1759 = vmatpush.bf16.msra.mxu0 %v411
    %1760 = vmatpush.bf16.msra.mxu0 %v407
    %1761 = vmatpush.bf16.msra.mxu0 %v403
    %1762 = vmatpush.bf16.msra.mxu0 %v399
    %1763 = vmatpush.bf16.msra.mxu0 %v395
    %1764 = vmatpush.bf16.msra.mxu0 %v391
    %1765 = vmatpush.bf16.msra.mxu0 %v387
    %1766 = vmatpush.bf16.msra.mxu0 %v383
    %1767 = vmatmul.bf16.gmra.mxu0 %v1670
    %v1768 = vpop.f32.mrf.mxu0
    %v1769 = vadd.f32 %v1756, %v1768
    %v1770 = vpop.f32.mrf.mxu0
    %1771 = vdwg.mxu0
    %1772 = vmatpush.bf16.msra.mxu0 %v380
    %1773 = vmatpush.bf16.msra.mxu0 %v376
    %1774 = vmatpush.bf16.msra.mxu0 %v372
    %1775 = vmatpush.bf16.msra.mxu0 %v368
    %1776 = vmatpush.bf16.msra.mxu0 %v364
    %1777 = vmatpush.bf16.msra.mxu0 %v360
    %1778 = vmatpush.bf16.msra.mxu0 %v356
    %1779 = vmatpush.bf16.msra.mxu0 %v352
    %1780 = vmatmul.bf16.gmra.mxu0 %v1719
    %v1781 = vpop.f32.mrf.mxu0
    %v1782 = vadd.f32 0.0, %v1781
    %v1783 = vpop.f32.mrf.mxu0
    %1784 = vdwg.mxu0
    %1785 = vmatpush.bf16.msra.mxu0 %v412
    %1786 = vmatpush.bf16.msra.mxu0 %v408
    %1787 = vmatpush.bf16.msra.mxu0 %v404
    %1788 = vmatpush.bf16.msra.mxu0 %v400
    %1789 = vmatpush.bf16.msra.mxu0 %v396
    %1790 = vmatpush.bf16.msra.mxu0 %v392
    %1791 = vmatpush.bf16.msra.mxu0 %v388
    %1792 = vmatpush.bf16.msra.mxu0 %v384
    %1793 = vmatmul.bf16.gmra.mxu0 %v1670
    %v1794 = vpop.f32.mrf.mxu0
    %v1795 = vadd.f32 %v1782, %v1794
    %v1796 = vpop.f32.mrf.mxu0
    %1797 = vdwg.mxu0
    %1798 = vmatpush.bf16.msra.mxu0 %v381
    %1799 = vmatpush.bf16.msra.mxu0 %v377
    %1800 = vmatpush.bf16.msra.mxu0 %v373
    %1801 = vmatpush.bf16.msra.mxu0 %v369
    %1802 = vmatpush.bf16.msra.mxu0 %v365
    %1803 = vmatpush.bf16.msra.mxu0 %v361
    %1804 = vmatpush.bf16.msra.mxu0 %v357
    %1805 = vmatpush.bf16.msra.mxu0 %v353
    %1806 = vmatmul.bf16.gmra.mxu0 %v1719
    %v1807 = vpop.f32.mrf.mxu0
    %v1808 = vadd.f32 0.0, %v1807
    %v1809 = vpop.f32.mrf.mxu0
    %1810 = vdwg.mxu0
    %1811 = vmatpush.bf16.msra.mxu0 %v413
    %1812 = vmatpush.bf16.msra.mxu0 %v409
    %1813 = vmatpush.bf16.msra.mxu0 %v405
    %1814 = vmatpush.bf16.msra.mxu0 %v401
    %1815 = vmatpush.bf16.msra.mxu0 %v397
    %1816 = vmatpush.bf16.msra.mxu0 %v393
    %1817 = vmatpush.bf16.msra.mxu0 %v389
    %1818 = vmatpush.bf16.msra.mxu0 %v385
    %1819 = vmatmul.bf16.gmra.mxu0 %v1670
    %v1820 = vpop.f32.mrf.mxu0
    %v1821 = vadd.f32 %v1808, %v1820
    %v1822 = vpop.f32.mrf.mxu0
    %1823 = vdwg.mxu0
    %v1824 = vxor.u32 %v1743, 2147483648
    %v1825 = vmul.f32 %v1824, 1.442695
    %v1826 = vpow.pop %v1825
    %v1827 = vadd.f32 %v1826, 1.0
    %v1828 = vrcp.pop %v1827
    %v1829 = vmul.f32 %v1827, %v1828
    %v1830 = vsub.f32 1.0, %v1829
    %v1831 = vmul.f32 %v1828, %v1830
    %v1832 = vadd.f32 %v1828, %v1831
    %vm1833 = vweird.f32 %v1827
    %vm1834 = vweird.f32 %v1828
    %vm1835 = vmor %vm1833, %vm1834
    %v1836 = vsel %vm1835, %v1828, %v1832
    %v1837 = vand.u32 2147483647, %v1827
    %vm1838 = vcmp.eq.f32.partialorder %v1837, 8.507059e+37
    %v1839 = vand.u32 %v1827, 2147483648
    %v1840 = vor.u32 1.1754944e-38, %v1839
    %v1841 = vsel %vm1838, %v1840, %v1836
    %v1842 = vmul.f32 1.0, %v1841
    %v1843 = vxor.u32 %v1769, 2147483648
    %v1844 = vmul.f32 %v1843, 1.442695
    %v1845 = vpow.pop %v1844
    %v1846 = vadd.f32 %v1845, 1.0
    %v1847 = vrcp.pop %v1846
    %v1848 = vmul.f32 %v1846, %v1847
    %v1849 = vsub.f32 1.0, %v1848
    %v1850 = vmul.f32 %v1847, %v1849
    %v1851 = vadd.f32 %v1847, %v1850
    %vm1852 = vweird.f32 %v1846
    %vm1853 = vweird.f32 %v1847
    %vm1854 = vmor %vm1852, %vm1853
    %v1855 = vsel %vm1854, %v1847, %v1851
    %v1856 = vand.u32 2147483647, %v1846
    %vm1857 = vcmp.eq.f32.partialorder %v1856, 8.507059e+37
    %v1858 = vand.u32 %v1846, 2147483648
    %v1859 = vor.u32 1.1754944e-38, %v1858
    %v1860 = vsel %vm1857, %v1859, %v1855
    %v1861 = vmul.f32 1.0, %v1860
    %v1862 = vmul.f32 %v1842, %v1821
    %v1863 = vadd.f32 %v1795, %v1862
    %v1864 = vtanh.pop %v1863
    %v1865 = vsub.f32 1.0, %v1861
    %v1866 = vmul.f32 %v1865, %v1864
    %v1867 = vmul.f32 %v1861, %v1669
    %v1868 = vadd.f32 %v1866, %v1867
    %v1869 = vpack.c.bf16 %v1868, %v1868
    %1870 = vmatpush.bf16.msra.mxu0 %v667
    %1871 = vmatpush.bf16.msra.mxu0 %v666
    %1872 = vmatpush.bf16.msra.mxu0 %v665
    %1873 = vmatpush.bf16.msra.mxu0 %v664
    %1874 = vmatpush.bf16.msra.mxu0 %v663
    %1875 = vmatpush.bf16.msra.mxu0 %v662
    %1876 = vmatpush.bf16.msra.mxu0 %v661
    %1877 = vmatpush.bf16.msra.mxu0 %v660
    %1878 = vmatmul.bf16.gmra.mxu0 %v1869
    %v1879 = vpop.f32.mrf.mxu0
    %v1880 = vadd.f32 %v148, %v1879
    %v1881 = vpop.f32.mrf.mxu0
    %1882 = vdwg.mxu0
    %v1883 = vsel %vm689, %v1880, -inf
    %1884 = vmax.xlane.f32.xlu0 %v1883
    %v1885 = vpop.xlane.xlu0 %1884
    %v1886 = vsub.f32 %v1880, %v1885
    %v1887 = vmul.f32 %v1886, 1.442695
    %v1888 = vpow.pop %v1887
    %v1889 = vsel %vm689, %v1888, 0.0
    %1890 = vadd.xlane.f32.xlu0 %v1889
    %v1891 = vpop.xlane.xlu0 %1890
    %v1892 = vlog2.pop %v1891
    %v1893 = vmul.f32 %v1892, 0.6931472
    %v1894 = vadd.f32 %v1893, %v1885
    %v1895 = vsub.f32 %v1880, %v1894
    %s1896 = scalar_lea.vmem [#allocation8], 12
    %1897 = vst [vmem:[%s1896] sm:$0x3] %v1895
    %vm1898 = vcmp.ge.f32.partialorder %v1880, %v1885
    %v1899 = vsel %vm1898, %v151, 128
    %v1900 = vsel %vm689, %v1899, 2147483647
    %v1901 = vand.u32 %v1900, 65535
    %v1902 = vshra.s32 %v1900, 16
    %v1903 = vcvt.s32.f32 %v1901
    %v1904 = vcvt.s32.f32 %v1902
    %1905 = vmin.xlane.f32.xlu0 %v1904
    %v1906 = vpop.xlane.xlu0 %1905
    %vm1907 = vcmp.eq.f32.partialorder %v1904, %v1906
    %v1908 = vsel %vm1907, %v1903, inf
    %1909 = vmin.xlane.f32.xlu0 %v1908
    %v1910 = vpop.xlane.xlu0 %1909
    %v1911 = vcvt.f32.s32 %v1910
    %v1912 = vcvt.f32.s32 %v1906
    %v1913 = vshll.u32 %v1912, 16
    %v1914 = vadd.s32 %v1913, %v1911
    %vm1915 = vcmp.eq.s32.totalorder %v151, %v1914
    %v1916 = vsel %vm1915, 1, 0
    %v1917 = vcvt.s32.f32 %v1916
    %v1918 = vpack.c.bf16 %v1917, %v1917
    %1919 = vmatpush.bf16.msra.mxu0 %v378
    %1920 = vmatpush.bf16.msra.mxu0 %v374
    %1921 = vmatpush.bf16.msra.mxu0 %v370
    %1922 = vmatpush.bf16.msra.mxu0 %v366
    %1923 = vmatpush.bf16.msra.mxu0 %v362
    %1924 = vmatpush.bf16.msra.mxu0 %v358
    %1925 = vmatpush.bf16.msra.mxu0 %v354
    %1926 = vmatpush.bf16.msra.mxu0 %v350
    %1927 = vmatmul.bf16.gmra.mxu0 %v1918
    %v1928 = vpop.f32.mrf.mxu0
    %v1929 = vadd.f32 0.0, %v1928
    %v1930 = vpop.f32.mrf.mxu0
    %1931 = vdwg.mxu0
    %1932 = vmatpush.bf16.msra.mxu0 %v410
    %1933 = vmatpush.bf16.msra.mxu0 %v406
    %1934 = vmatpush.bf16.msra.mxu0 %v402
    %1935 = vmatpush.bf16.msra.mxu0 %v398
    %1936 = vmatpush.bf16.msra.mxu0 %v394
    %1937 = vmatpush.bf16.msra.mxu0 %v390
    %1938 = vmatpush.bf16.msra.mxu0 %v386
    %1939 = vmatpush.bf16.msra.mxu0 %v382
    %1940 = vmatmul.bf16.gmra.mxu0 %v1869
    %v1941 = vpop.f32.mrf.mxu0
    %v1942 = vadd.f32 %v1929, %v1941
    %v1943 = vpop.f32.mrf.mxu0
    %1944 = vdwg.mxu0
    %1945 = vmatpush.bf16.msra.mxu0 %v379
    %1946 = vmatpush.bf16.msra.mxu0 %v375
    %1947 = vmatpush.bf16.msra.mxu0 %v371
    %1948 = vmatpush.bf16.msra.mxu0 %v367
    %1949 = vmatpush.bf16.msra.mxu0 %v363
    %1950 = vmatpush.bf16.msra.mxu0 %v359
    %1951 = vmatpush.bf16.msra.mxu0 %v355
    %1952 = vmatpush.bf16.msra.mxu0 %v351
    %1953 = vmatmul.bf16.gmra.mxu0 %v1918
    %v1954 = vpop.f32.mrf.mxu0
    %v1955 = vadd.f32 0.0, %v1954
    %v1956 = vpop.f32.mrf.mxu0
    %1957 = vdwg.mxu0
    %1958 = vmatpush.bf16.msra.mxu0 %v411
    %1959 = vmatpush.bf16.msra.mxu0 %v407
    %1960 = vmatpush.bf16.msra.mxu0 %v403
    %1961 = vmatpush.bf16.msra.mxu0 %v399
    %1962 = vmatpush.bf16.msra.mxu0 %v395
    %1963 = vmatpush.bf16.msra.mxu0 %v391
    %1964 = vmatpush.bf16.msra.mxu0 %v387
    %1965 = vmatpush.bf16.msra.mxu0 %v383
    %1966 = vmatmul.bf16.gmra.mxu0 %v1869
    %v1967 = vpop.f32.mrf.mxu0
    %v1968 = vadd.f32 %v1955, %v1967
    %v1969 = vpop.f32.mrf.mxu0
    %1970 = vdwg.mxu0
    %1971 = vmatpush.bf16.msra.mxu0 %v380
    %1972 = vmatpush.bf16.msra.mxu0 %v376
    %1973 = vmatpush.bf16.msra.mxu0 %v372
    %1974 = vmatpush.bf16.msra.mxu0 %v368
    %1975 = vmatpush.bf16.msra.mxu0 %v364
    %1976 = vmatpush.bf16.msra.mxu0 %v360
    %1977 = vmatpush.bf16.msra.mxu0 %v356
    %1978 = vmatpush.bf16.msra.mxu0 %v352
    %1979 = vmatmul.bf16.gmra.mxu0 %v1918
    %v1980 = vpop.f32.mrf.mxu0
    %v1981 = vadd.f32 0.0, %v1980
    %v1982 = vpop.f32.mrf.mxu0
    %1983 = vdwg.mxu0
    %1984 = vmatpush.bf16.msra.mxu0 %v412
    %1985 = vmatpush.bf16.msra.mxu0 %v408
    %1986 = vmatpush.bf16.msra.mxu0 %v404
    %1987 = vmatpush.bf16.msra.mxu0 %v400
    %1988 = vmatpush.bf16.msra.mxu0 %v396
    %1989 = vmatpush.bf16.msra.mxu0 %v392
    %1990 = vmatpush.bf16.msra.mxu0 %v388
    %1991 = vmatpush.bf16.msra.mxu0 %v384
    %1992 = vmatmul.bf16.gmra.mxu0 %v1869
    %v1993 = vpop.f32.mrf.mxu0
    %v1994 = vadd.f32 %v1981, %v1993
    %v1995 = vpop.f32.mrf.mxu0
    %1996 = vdwg.mxu0
    %1997 = vmatpush.bf16.msra.mxu0 %v381
    %1998 = vmatpush.bf16.msra.mxu0 %v377
    %1999 = vmatpush.bf16.msra.mxu0 %v373
    %2000 = vmatpush.bf16.msra.mxu0 %v369
    %2001 = vmatpush.bf16.msra.mxu0 %v365
    %2002 = vmatpush.bf16.msra.mxu0 %v361
    %2003 = vmatpush.bf16.msra.mxu0 %v357
    %2004 = vmatpush.bf16.msra.mxu0 %v353
    %2005 = vmatmul.bf16.gmra.mxu0 %v1918
    %v2006 = vpop.f32.mrf.mxu0
    %v2007 = vadd.f32 0.0, %v2006
    %v2008 = vpop.f32.mrf.mxu0
    %2009 = vdwg.mxu0
    %2010 = vmatpush.bf16.msra.mxu0 %v413
    %2011 = vmatpush.bf16.msra.mxu0 %v409
    %2012 = vmatpush.bf16.msra.mxu0 %v405
    %2013 = vmatpush.bf16.msra.mxu0 %v401
    %2014 = vmatpush.bf16.msra.mxu0 %v397
    %2015 = vmatpush.bf16.msra.mxu0 %v393
    %2016 = vmatpush.bf16.msra.mxu0 %v389
    %2017 = vmatpush.bf16.msra.mxu0 %v385
    %2018 = vmatmul.bf16.gmra.mxu0 %v1869
    %v2019 = vpop.f32.mrf.mxu0
    %v2020 = vadd.f32 %v2007, %v2019
    %v2021 = vpop.f32.mrf.mxu0
    %2022 = vdwg.mxu0
    %v2023 = vxor.u32 %v1942, 2147483648
    %v2024 = vmul.f32 %v2023, 1.442695
    %v2025 = vpow.pop %v2024
    %v2026 = vadd.f32 %v2025, 1.0
    %v2027 = vrcp.pop %v2026
    %v2028 = vmul.f32 %v2026, %v2027
    %v2029 = vsub.f32 1.0, %v2028
    %v2030 = vmul.f32 %v2027, %v2029
    %v2031 = vadd.f32 %v2027, %v2030
    %vm2032 = vweird.f32 %v2026
    %vm2033 = vweird.f32 %v2027
    %vm2034 = vmor %vm2032, %vm2033
    %v2035 = vsel %vm2034, %v2027, %v2031
    %v2036 = vand.u32 2147483647, %v2026
    %vm2037 = vcmp.eq.f32.partialorder %v2036, 8.507059e+37
    %v2038 = vand.u32 %v2026, 2147483648
    %v2039 = vor.u32 1.1754944e-38, %v2038
    %v2040 = vsel %vm2037, %v2039, %v2035
    %v2041 = vmul.f32 1.0, %v2040
    %v2042 = vxor.u32 %v1968, 2147483648
    %v2043 = vmul.f32 %v2042, 1.442695
    %v2044 = vpow.pop %v2043
    %v2045 = vadd.f32 %v2044, 1.0
    %v2046 = vrcp.pop %v2045
    %v2047 = vmul.f32 %v2045, %v2046
    %v2048 = vsub.f32 1.0, %v2047
    %v2049 = vmul.f32 %v2046, %v2048
    %v2050 = vadd.f32 %v2046, %v2049
    %vm2051 = vweird.f32 %v2045
    %vm2052 = vweird.f32 %v2046
    %vm2053 = vmor %vm2051, %vm2052
    %v2054 = vsel %vm2053, %v2046, %v2050
    %v2055 = vand.u32 2147483647, %v2045
    %vm2056 = vcmp.eq.f32.partialorder %v2055, 8.507059e+37
    %v2057 = vand.u32 %v2045, 2147483648
    %v2058 = vor.u32 1.1754944e-38, %v2057
    %v2059 = vsel %vm2056, %v2058, %v2054
    %v2060 = vmul.f32 1.0, %v2059
    %v2061 = vmul.f32 %v2041, %v2020
    %v2062 = vadd.f32 %v1994, %v2061
    %v2063 = vtanh.pop %v2062
    %v2064 = vsub.f32 1.0, %v2060
    %v2065 = vmul.f32 %v2064, %v2063
    %v2066 = vmul.f32 %v2060, %v1868
    %v2067 = vadd.f32 %v2065, %v2066
    %v2068 = vpack.c.bf16 %v2067, %v2067
    %2069 = vmatpush.bf16.msra.mxu0 %v667
    %2070 = vmatpush.bf16.msra.mxu0 %v666
    %2071 = vmatpush.bf16.msra.mxu0 %v665
    %2072 = vmatpush.bf16.msra.mxu0 %v664
    %2073 = vmatpush.bf16.msra.mxu0 %v663
    %2074 = vmatpush.bf16.msra.mxu0 %v662
    %2075 = vmatpush.bf16.msra.mxu0 %v661
    %2076 = vmatpush.bf16.msra.mxu0 %v660
    %2077 = vmatmul.bf16.gmra.mxu0 %v2068
    %v2078 = vpop.f32.mrf.mxu0
    %v2079 = vadd.f32 %v148, %v2078
    %v2080 = vpop.f32.mrf.mxu0
    %2081 = vdwg.mxu0
    %v2082 = vsel %vm689, %v2079, -inf
    %2083 = vmax.xlane.f32.xlu0 %v2082
    %v2084 = vpop.xlane.xlu0 %2083
    %v2085 = vsub.f32 %v2079, %v2084
    %v2086 = vmul.f32 %v2085, 1.442695
    %v2087 = vpow.pop %v2086
    %v2088 = vsel %vm689, %v2087, 0.0
    %2089 = vadd.xlane.f32.xlu0 %v2088
    %v2090 = vpop.xlane.xlu0 %2089
    %v2091 = vlog2.pop %v2090
    %v2092 = vmul.f32 %v2091, 0.6931472
    %v2093 = vadd.f32 %v2092, %v2084
    %v2094 = vsub.f32 %v2079, %v2093
    %s2095 = scalar_lea.vmem [#allocation8], 14
    %2096 = vst [vmem:[%s2095] sm:$0x3] %v2094
    %2097 = vst [vmem:[#allocation9] sm:$0x3] %v2067
    // Predicated region
    $region30: #{tpu_custom_call.1} parent=1 // pred_check
      _
    $region31: #{tpu_custom_call.1} parent=1 // pred_check_branch
      %2099 = sbr.rel (0) target = $region33
    $region32: #{tpu_custom_call.1} parent=1 // pred_region
      %2101 = vsyncadd [#allocation4], 0
      %s2102 = sshll.u32 [#allocation8], 4
      %s2103 = int_to_ptr.vmem [resolvable:$true] %s2102
      %s2104 = sshll.u32 %s4, 4
      %s2105 = int_to_ptr.hbm [resolvable:$true] %s2104
      %2110 = dma.vmem_to_hbm [thread:$0]  %s2103, 256, %s2105, [#allocation4], 32, 32, 2
    $region33: #{tpu_custom_call.1} parent=1 // pred_fallthru
      _
    // Predicated region
    $region34: #{tpu_custom_call.1} parent=1 // pred_check
      _
    $region35: #{tpu_custom_call.1} parent=1 // pred_check_branch
      %2112 = sbr.rel (0) target = $region37
    $region36: #{tpu_custom_call.1} parent=1 // pred_region
      %2114 = vsyncadd [#allocation10], 0
      %s2116 = sshll.u32 [#allocation9], 4
      %s2117 = int_to_ptr.vmem [resolvable:$true] %s2116
      %s2118 = sshll.u32 %s5, 4
      %s2119 = int_to_ptr.hbm [resolvable:$true] %s2118
      %2121 = dma.vmem_to_hbm [thread:$0]  %s2117, 32, %s2119, [#allocation10]
    $region37: #{tpu_custom_call.1} parent=1 // pred_fallthru
      _
    // Predicated region
    $region38: #{tpu_custom_call.1} parent=1 // pred_check
      _
    $region39: #{tpu_custom_call.1} parent=1 // pred_check_branch
      %2123 = sbr.rel (0) target = $region41
    $region40: #{tpu_custom_call.1} parent=1 // pred_region
      %2125 = dma.done [#allocation4], 256
    $region41: #{tpu_custom_call.1} parent=1 // pred_fallthru
      _
    // Predicated region
    $region42: #{tpu_custom_call.1} parent=1 // pred_check
      _
    $region43: #{tpu_custom_call.1} parent=1 // pred_check_branch
      %2127 = sbr.rel (0) target = $region45
    $region44: #{tpu_custom_call.1} parent=1 // pred_region
      %2129 = dma.done [#allocation10], 32
    $region45: #{tpu_custom_call.1} parent=1 // pred_fallthru
      _
    %2130 = vsyncpa [#allocation3], 1
    %2131 = vsyncpa [#allocation6], 1
    %2132 = vsyncpa [#allocation4], 1
    %2133 = vsyncpa [#allocation10], 1

</llo_original>
